<compile_context>
chip_gen: v6e
topology: v6e:2x2x1
jax: 0.10.0
libtpu: 0.0.40
codegen_flags: <defaults>
</compile_context>

<pallas_src>
import functools

import jax
import jax.numpy as jnp
from jax.experimental import pallas as pl
from jax.experimental.pallas import tpu as pltpu


def _round_up(x, m):
    return ((x + m - 1) // m) * m


def _vmem_limit_bytes():
    """Chip-aware scoped-VMEM budget: ~half of physical VMEM, clamped."""
    try:
        cap = int(pltpu.get_tpu_info().vmem_capacity_bytes)
    except Exception:
        cap = 128 << 20                      # v5e / v6e physical VMEM
    return int(min(96 << 20, max(24 << 20, cap // 2)))


# --------------------------------------------------------------------------
# Kernels
# --------------------------------------------------------------------------
def _fused_conv_kernel(x_ref, w_ref, b_ref, o_ref, *, kh, kw, dilation, th, wo,
                       relu):
    """Fused conv (stride=1): one K = kh*kw*Cin matmul per output row tile.

    x_ref : (1, Hp_ext, Wp, Cin)      padded NHWC image (resident per batch)
    w_ref : (kh*kw*Cin, Cout_pad)     BN-scale-folded weight matrix
    b_ref : (1, Cout_pad)             folded BN bias (f32)
    o_ref : (1, th, Wo, Cout_pad)     lane-dense output tile
    """
    t = pl.program_id(1)
    cin = x_ref.shape[-1]
    cout_p = o_ref.shape[-1]

    r0 = t * th
    if th % 8 == 0:
        r0 = pl.multiple_of(r0, 8)

    # Concatenate the kh*kw shifted windows along the channel axis so the whole
    # tile is ONE MXU matmul with contraction depth kh*kw*Cin (instead of kh*kw
    # shallow dots each read-modify-writing the accumulator).
    cols = []
    for i in range(kh):
        for j in range(kw):
            cols.append(x_ref[0,
                              pl.ds(r0 + i * dilation, th),
                              pl.ds(j * dilation, wo),
                              :])                       # (th, wo, cin)
    patches = cols[0] if len(cols) == 1 else jnp.concatenate(cols, axis=-1)
    patches = patches.reshape(th * wo, kh * kw * cin)

    y = jnp.dot(patches, w_ref[...], preferred_element_type=jnp.float32)
    y = y + b_ref[...]
    if relu:
        y = jnp.maximum(y, 0.0)
    o_ref[...] = y.reshape(1, th, wo, cout_p).astype(o_ref.dtype)


def _matmul_bias_kernel(p_ref, w_ref, b_ref, o_ref, *, relu):
    """im2col fallback: one M-tile matmul fused with bias-add (+ReLU)."""
    acc = jnp.dot(p_ref[...], w_ref[...], preferred_element_type=jnp.float32)
    y = acc + b_ref[...]
    if relu:
        y = jnp.maximum(y, 0.0)
    o_ref[...] = y.astype(o_ref.dtype)


# --------------------------------------------------------------------------
# Helpers
# --------------------------------------------------------------------------
def _im2col_nhwc(x_nhwc, kh, kw, stride, padding, dilation):
    """Extract conv patches.  Returns [N*Ho*Wo, kh*kw*Cin], Ho, Wo."""
    n, h, w, c = x_nhwc.shape
    xp = jnp.pad(x_nhwc, ((0, 0), (padding, padding), (padding, padding), (0, 0)))
    ho = (h + 2 * padding - dilation * (kh - 1) - 1) // stride + 1
    wo = (w + 2 * padding - dilation * (kw - 1) - 1) // stride + 1
    cols = []
    for i in range(kh):
        for j in range(kw):
            sl = xp[:,
                    i * dilation: i * dilation + stride * (ho - 1) + 1: stride,
                    j * dilation: j * dilation + stride * (wo - 1) + 1: stride,
                    :]
            cols.append(sl)                              # [N, Ho, Wo, C]
    patches = jnp.stack(cols, axis=3)                    # [N, Ho, Wo, kh*kw, C]
    return patches.reshape(n * ho * wo, kh * kw * c), ho, wo


def _pick_row_tile(ho, wo, n):
    """Rows per output tile: f32 accumulator <= ~512 KiB (th*wo <= 1024 rows),
    prefer multiples of 8, guarantee >= 2 row tiles when n == 1 (v7x megacore)."""
    max_rows = max(1, 1024 // max(wo, 1))
    th = min(ho, max_rows)
    if n == 1 and ho >= 2:
        th = min(th, -(-ho // 2))          # at least 2 tiles for 2 TensorCores
    if th >= 8:
        th = (th // 8) * 8
    return max(th, 1)


def _pick_m_tile(m, k, bytes_per, budget):
    """M tile for im2col path: large (per-step overhead ~0.35us) but VMEM-safe."""
    k_l = _round_up(max(k, 1), 128)
    per_row = 2 * k_l * bytes_per + 2 * 128 * 4 + k_l * 4   # dbl-buf in/out + acc
    cap = max(128, (budget // 4) // per_row)
    tm = max(128, (min(1024, cap) // 128) * 128)
    return min(tm, _round_up(m, 128))


# --------------------------------------------------------------------------
# Forward
# --------------------------------------------------------------------------
@functools.partial(jax.jit, static_argnames=("stride", "padding", "dilation",
                                             "relu", "bn", "compute_dtype"))
def basic_conv_forward(x_nchw, conv_w, bn_gamma, bn_beta, bn_mean, bn_var, *,
                       stride=1, padding=0, dilation=1, relu=True, bn=True,
                       eps=1e-5, compute_dtype=jnp.bfloat16):
    """Forward pass of BasicConv.  x_nchw: [N, Cin, H, W] (PyTorch layout)."""
    cout, cin, kh, kw = conv_w.shape
    n, _, h, w_in = x_nchw.shape
    ho = (h + 2 * padding - dilation * (kh - 1) - 1) // stride + 1
    wo = (w_in + 2 * padding - dilation * (kw - 1) - 1) // stride + 1

    # Fold BN (eval semantics) into per-channel scale/bias; fold scale into W.
    if bn:
        scale = bn_gamma / jnp.sqrt(bn_var + eps)
        bias = bn_beta - bn_mean * scale
    else:
        scale = jnp.ones((cout,), jnp.float32)
        bias = jnp.zeros((cout,), jnp.float32)

    cout_pad = _round_up(max(cout, 128), 128)             # lane-dense output
    k_dim = kh * kw * cin
    w_hwio = jnp.transpose(conv_w, (2, 3, 1, 0)).astype(jnp.float32) * scale
    w_hwio = jnp.pad(w_hwio, ((0, 0), (0, 0), (0, 0), (0, cout_pad - cout)))
    w_mat = w_hwio.reshape(k_dim, cout_pad).astype(compute_dtype)  # (i,j,ch) major->minor
    bias_p = jnp.pad(bias.astype(jnp.float32),
                     (0, cout_pad - cout)).reshape(1, cout_pad)

    # NCHW -> NHWC internal layout.
    # TODO(synk): an NHWC end-to-end model would avoid these transposes.
    x_nhwc = jnp.transpose(x_nchw, (0, 2, 3, 1)).astype(compute_dtype)

    bytes_per = jnp.dtype(compute_dtype).itemsize
    sub = 8 if bytes_per == 4 else 16
    budget = _vmem_limit_bytes()

    th = _pick_row_tile(ho, wo, n)
    ho_pad = _round_up(ho, th)
    hp_ext = ho_pad + dilation * (kh - 1)                 # resident rows incl. ho padding
    wp = w_in + 2 * padding
    # Resident VMEM footprint of one padded image (lane/sublane padded, x2 buffers).
    resident = 2 * hp_ext * _round_up(wp, sub) * _round_up(cin, 128) * bytes_per
    use_fused = (stride == 1) and (resident <= budget // 2)

    if use_fused:
        # ---- fused path: patch extraction + single matmul inside the kernel --
        extra = ho_pad - ho
        xpad = jnp.pad(
            x_nhwc,
            ((0, 0), (padding, padding + extra), (padding, padding), (0, 0)))
        kernel = functools.partial(_fused_conv_kernel, kh=kh, kw=kw,
                                   dilation=dilation, th=th, wo=wo, relu=relu)
        out_nhwc_p = pl.pallas_call(
            kernel,
            out_shape=jax.ShapeDtypeStruct((n, ho_pad, wo, cout_pad), jnp.float32),
            grid_spec=pltpu.PrefetchScalarGridSpec(
                num_scalar_prefetch=0,
                grid=(n, ho_pad // th),
                in_specs=[
                    # full padded image resident across the row-tile axis
                    pl.BlockSpec((1, hp_ext, wp, cin), lambda b, t: (b, 0, 0, 0)),
                    pl.BlockSpec((k_dim, cout_pad), lambda b, t: (0, 0)),
                    pl.BlockSpec((1, cout_pad), lambda b, t: (0, 0)),
                ],
                out_specs=pl.BlockSpec((1, th, wo, cout_pad),
                                       lambda b, t: (b, t, 0, 0)),
            ),
            compiler_params=pltpu.CompilerParams(
                dimension_semantics=("parallel", "parallel"),
                vmem_limit_bytes=budget),
        )(xpad, w_mat, bias_p)
        # Fused row/channel slice + NHWC -> NCHW transpose (single XLA copy).
        out = jnp.transpose(out_nhwc_p, (0, 3, 1, 2))[:, :cout, :ho, :]
    else:
        # ---- fallback: im2col matmul (stride > 1 or image too large) --------
        patches, _, _ = _im2col_nhwc(x_nhwc, kh, kw, stride, padding, dilation)
        m, k = patches.shape
        tm = _pick_m_tile(m, k, bytes_per, budget)
        m_pad = _round_up(m, tm)
        patches_p = jnp.pad(patches, ((0, m_pad - m), (0, 0)))
        kernel = functools.partial(_matmul_bias_kernel, relu=relu)
        out_flat = pl.pallas_call(
            kernel,
            out_shape=jax.ShapeDtypeStruct((m_pad, cout_pad), jnp.float32),
            grid_spec=pltpu.PrefetchScalarGridSpec(
                num_scalar_prefetch=0,
                grid=(m_pad // tm,),
                in_specs=[
                    pl.BlockSpec((tm, k), lambda i: (i, 0)),
                    pl.BlockSpec((k, cout_pad), lambda i: (0, 0)),
                    pl.BlockSpec((1, cout_pad), lambda i: (0, 0)),
                ],
                out_specs=pl.BlockSpec((tm, cout_pad), lambda i: (i, 0)),
            ),
            compiler_params=pltpu.CompilerParams(
                dimension_semantics=("parallel",),
                vmem_limit_bytes=budget),
        )(patches_p, w_mat, bias_p)
        out_nhwc = out_flat[:m, :cout].reshape(n, ho, wo, cout)
        out = jnp.transpose(out_nhwc, (0, 3, 1, 2))

    return out                                           # NCHW


# --------------------------------------------------------------------------
# Pure-JAX reference (conv + eval BN + ReLU) for verification
# --------------------------------------------------------------------------
def _reference(x_nchw, conv_w, gamma, beta, mean, var, stride, padding,
               dilation, *, relu=True, bn=True, eps=1e-5):
    y = jax.lax.conv_general_dilated(
        x_nchw.astype(jnp.float32), conv_w.astype(jnp.float32),
        window_strides=(stride, stride),
        padding=[(padding, padding), (padding, padding)],
        rhs_dilation=(dilation, dilation),
        dimension_numbers=("NCHW", "OIHW", "NCHW"))
    if bn:
        s = (gamma / jnp.sqrt(var + eps)).reshape(1, -1, 1, 1)
        b = (beta - mean * gamma / jnp.sqrt(var + eps)).reshape(1, -1, 1, 1)
        y = y * s + b
    if relu:
        y = jnp.maximum(y, 0.0)
    return y


if __name__ == "__main__":
    key = jax.random.PRNGKey(0)
    kx, kw_, kg, kb, km, kv, kw1 = jax.random.split(key, 7)

    # BasicConv(in_planes=4, out_planes=8, kernel_size=3, stride=1, padding=1)
    N, Cin, H, W = 2, 4, 16, 16
    Cout, KH, KW = 8, 3, 3

    x = jax.random.normal(kx, (N, Cin, H, W), jnp.float32)
    fan_out = Cout * KH * KW                               # c2_msra_fill
    conv_w = jax.random.normal(kw_, (Cout, Cin, KH, KW), jnp.float32) \
        * jnp.sqrt(2.0 / fan_out)
    gamma = 1.0 + 0.1 * jax.random.normal(kg, (Cout,), jnp.float32)
    beta = 0.1 * jax.random.normal(kb, (Cout,), jnp.float32)
    run_mean = 0.1 * jax.random.normal(km, (Cout,), jnp.float32)
    run_var = 1.0 + 0.1 * jax.random.uniform(kv, (Cout,), jnp.float32)

    # 1) stride=1 fused single-matmul path, f32 compute (strict tolerance).
    out = basic_conv_forward(x, conv_w, gamma, beta, run_mean, run_var,
                             stride=1, padding=1, dilation=1,
                             compute_dtype=jnp.float32)
    out = jax.block_until_ready(out)
    ref = _reference(x, conv_w, gamma, beta, run_mean, run_var, 1, 1, 1)
    assert out.shape == (N, Cout, H, W), out.shape
    assert jnp.max(jnp.abs(out - ref)) < 5e-4, float(jnp.max(jnp.abs(out - ref)))

    # 2) default compute dtype (bf16 MXU fast path), relaxed tolerance.
    out_bf = basic_conv_forward(x, conv_w, gamma, beta, run_mean, run_var,
                                stride=1, padding=1, dilation=1)
    out_bf = jax.block_until_ready(out_bf)
    assert jnp.max(jnp.abs(out_bf - ref)) < 5e-2, \
        float(jnp.max(jnp.abs(out_bf - ref)))

    # 3) stride=2 -> im2col fallback path.
    out_s2 = basic_conv_forward(x, conv_w, gamma, beta, run_mean, run_var,
                                stride=2, padding=1, dilation=1,
                                compute_dtype=jnp.float32)
    out_s2 = jax.block_until_ready(out_s2)
    ref_s2 = _reference(x, conv_w, gamma, beta, run_mean, run_var, 2, 1, 1)
    assert out_s2.shape == (N, Cout, 8, 8), out_s2.shape
    assert jnp.max(jnp.abs(out_s2 - ref_s2)) < 5e-4, \
        float(jnp.max(jnp.abs(out_s2 - ref_s2)))

    # 4) relu=False, bn=False, 1x1 conv (flags honored; K = Cin only).
    conv_w1 = jax.random.normal(kw1, (Cout, Cin, 1, 1), jnp.float32) \
        * jnp.sqrt(2.0 / Cout)
    ones_c = jnp.ones((Cout,), jnp.float32)
    zeros_c = jnp.zeros((Cout,), jnp.float32)
    out_nr = basic_conv_forward(x, conv_w1, ones_c, zeros_c, zeros_c, ones_c,
                                stride=1, padding=0, dilation=1,
                                relu=False, bn=False,
                                compute_dtype=jnp.float32)
    out_nr = jax.block_until_ready(out_nr)
    ref_nr = _reference(x, conv_w1, ones_c, zeros_c, zeros_c, ones_c, 1, 0, 1,
                        relu=False, bn=False)
    assert jnp.max(jnp.abs(out_nr - ref_nr)) < 5e-4, \
        float(jnp.max(jnp.abs(out_nr - ref_nr)))
    assert bool((out_nr < 0).any())            # ReLU genuinely disabled

    # 5) padding=0 -> ho=14 (not divisible by the row tile): ho is padded up.
    out_np = basic_conv_forward(x, conv_w, gamma, beta, run_mean, run_var,
                                stride=1, padding=0, dilation=1,
                                compute_dtype=jnp.float32)
    out_np = jax.block_until_ready(out_np)
    ref_np = _reference(x, conv_w, gamma, beta, run_mean, run_var, 1, 0, 1)
    assert out_np.shape == (N, Cout, 14, 14), out_np.shape
    assert jnp.max(jnp.abs(out_np - ref_np)) < 5e-4, \
        float(jnp.max(jnp.abs(out_np - ref_np)))

    print("KERNEL_OK")
</pallas_src>

<mosaic_0001>
module attributes {stable_mosaic.version = 11 : i64} {
  func.func @_fused_conv_kernel(%arg0: i32, %arg1: i32, %arg2: memref<1x18x18x4xf32, #tpu.memory_space<vmem>>, %arg3: memref<36x128xf32, #tpu.memory_space<vmem>>, %arg4: memref<1x128xf32, #tpu.memory_space<vmem>>, %arg5: memref<1x16x16x128xf32, #tpu.memory_space<vmem>>) attributes {dimension_semantics = [#tpu.dimension_semantics<parallel>, #tpu.dimension_semantics<parallel>], iteration_bounds = array<i64: 2, 1>, scalar_prefetch = 0 : i64, scratch_operands = 0 : i64, tpu.core_type = #tpu.core_type<tc>, window_params = [{transform_indices = @transform_0, window_bounds = array<i64: 1, 18, 18, 4>}, {pipeline_mode = #tpu.pipeline_mode<synchronous>, transform_indices = @transform_1, window_bounds = array<i64: 36, 128>}, {pipeline_mode = #tpu.pipeline_mode<synchronous>, transform_indices = @transform_2, window_bounds = array<i64: 1, 128>}, {transform_indices = @transform_3, window_bounds = array<i64: 1, 16, 16, 128>}]} {
    %c16_i32 = arith.constant 16 : i32
    %0 = arith.muli %arg1, %c16_i32 : i32
    %1 = tpu.assume_multiple %0, 8 : i32
    %c0_i32 = arith.constant 0 : i32
    %2 = arith.addi %1, %c0_i32 : i32
    %c0 = arith.constant 0 : index
    %3 = arith.index_cast %2 : i32 to index
    %c0_0 = arith.constant 0 : index
    %c0_1 = arith.constant 0 : index
    %4 = vector.load %arg2[%c0, %3, %c0_0, %c0_1] : memref<1x18x18x4xf32, #tpu.memory_space<vmem>>, vector<1x16x16x4xf32>
    %5 = vector.shape_cast %4 : vector<1x16x16x4xf32> to vector<16x16x4xf32>
    %c0_i32_2 = arith.constant 0 : i32
    %6 = arith.addi %1, %c0_i32_2 : i32
    %c0_3 = arith.constant 0 : index
    %7 = arith.index_cast %6 : i32 to index
    %c1 = arith.constant 1 : index
    %c0_4 = arith.constant 0 : index
    %8 = vector.load %arg2[%c0_3, %7, %c1, %c0_4] : memref<1x18x18x4xf32, #tpu.memory_space<vmem>>, vector<1x16x16x4xf32>
    %9 = vector.shape_cast %8 : vector<1x16x16x4xf32> to vector<16x16x4xf32>
    %c0_i32_5 = arith.constant 0 : i32
    %10 = arith.addi %1, %c0_i32_5 : i32
    %c0_6 = arith.constant 0 : index
    %11 = arith.index_cast %10 : i32 to index
    %c2 = arith.constant 2 : index
    %c0_7 = arith.constant 0 : index
    %12 = vector.load %arg2[%c0_6, %11, %c2, %c0_7] : memref<1x18x18x4xf32, #tpu.memory_space<vmem>>, vector<1x16x16x4xf32>
    %13 = vector.shape_cast %12 : vector<1x16x16x4xf32> to vector<16x16x4xf32>
    %c1_i32 = arith.constant 1 : i32
    %14 = arith.addi %1, %c1_i32 : i32
    %c0_8 = arith.constant 0 : index
    %15 = arith.index_cast %14 : i32 to index
    %c0_9 = arith.constant 0 : index
    %c0_10 = arith.constant 0 : index
    %16 = vector.load %arg2[%c0_8, %15, %c0_9, %c0_10] : memref<1x18x18x4xf32, #tpu.memory_space<vmem>>, vector<1x16x16x4xf32>
    %17 = vector.shape_cast %16 : vector<1x16x16x4xf32> to vector<16x16x4xf32>
    %c1_i32_11 = arith.constant 1 : i32
    %18 = arith.addi %1, %c1_i32_11 : i32
    %c0_12 = arith.constant 0 : index
    %19 = arith.index_cast %18 : i32 to index
    %c1_13 = arith.constant 1 : index
    %c0_14 = arith.constant 0 : index
    %20 = vector.load %arg2[%c0_12, %19, %c1_13, %c0_14] : memref<1x18x18x4xf32, #tpu.memory_space<vmem>>, vector<1x16x16x4xf32>
    %21 = vector.shape_cast %20 : vector<1x16x16x4xf32> to vector<16x16x4xf32>
    %c1_i32_15 = arith.constant 1 : i32
    %22 = arith.addi %1, %c1_i32_15 : i32
    %c0_16 = arith.constant 0 : index
    %23 = arith.index_cast %22 : i32 to index
    %c2_17 = arith.constant 2 : index
    %c0_18 = arith.constant 0 : index
    %24 = vector.load %arg2[%c0_16, %23, %c2_17, %c0_18] : memref<1x18x18x4xf32, #tpu.memory_space<vmem>>, vector<1x16x16x4xf32>
    %25 = vector.shape_cast %24 : vector<1x16x16x4xf32> to vector<16x16x4xf32>
    %c2_i32 = arith.constant 2 : i32
    %26 = arith.addi %1, %c2_i32 : i32
    %c0_19 = arith.constant 0 : index
    %27 = arith.index_cast %26 : i32 to index
    %c0_20 = arith.constant 0 : index
    %c0_21 = arith.constant 0 : index
    %28 = vector.load %arg2[%c0_19, %27, %c0_20, %c0_21] : memref<1x18x18x4xf32, #tpu.memory_space<vmem>>, vector<1x16x16x4xf32>
    %29 = vector.shape_cast %28 : vector<1x16x16x4xf32> to vector<16x16x4xf32>
    %c2_i32_22 = arith.constant 2 : i32
    %30 = arith.addi %1, %c2_i32_22 : i32
    %c0_23 = arith.constant 0 : index
    %31 = arith.index_cast %30 : i32 to index
    %c1_24 = arith.constant 1 : index
    %c0_25 = arith.constant 0 : index
    %32 = vector.load %arg2[%c0_23, %31, %c1_24, %c0_25] : memref<1x18x18x4xf32, #tpu.memory_space<vmem>>, vector<1x16x16x4xf32>
    %33 = vector.shape_cast %32 : vector<1x16x16x4xf32> to vector<16x16x4xf32>
    %c2_i32_26 = arith.constant 2 : i32
    %34 = arith.addi %1, %c2_i32_26 : i32
    %c0_27 = arith.constant 0 : index
    %35 = arith.index_cast %34 : i32 to index
    %c2_28 = arith.constant 2 : index
    %c0_29 = arith.constant 0 : index
    %36 = vector.load %arg2[%c0_27, %35, %c2_28, %c0_29] : memref<1x18x18x4xf32, #tpu.memory_space<vmem>>, vector<1x16x16x4xf32>
    %37 = vector.shape_cast %36 : vector<1x16x16x4xf32> to vector<16x16x4xf32>
    %38 = tpu.concatenate %5, %9, %13, %17, %21, %25, %29, %33, %37 in 2 : vector<16x16x4xf32>, vector<16x16x4xf32>, vector<16x16x4xf32>, vector<16x16x4xf32>, vector<16x16x4xf32>, vector<16x16x4xf32>, vector<16x16x4xf32>, vector<16x16x4xf32>, vector<16x16x4xf32> -> vector<16x16x36xf32>
    %39 = vector.shape_cast %38 : vector<16x16x36xf32> to vector<256x36xf32>
    %c0_30 = arith.constant 0 : index
    %c0_31 = arith.constant 0 : index
    %40 = vector.load %arg3[%c0_30, %c0_31] : memref<36x128xf32, #tpu.memory_space<vmem>>, vector<36x128xf32>
    %cst = arith.constant dense<0.000000e+00> : vector<256x128xf32>
    %41 = tpu.matmul %39, %40, %cst {dimension_numbers = #tpu.dot_dimension_numbers<[1], [0], [0], [1], [0, 0, 1, 1], [], []>} : vector<256x36xf32>, vector<36x128xf32>, vector<256x128xf32> -> vector<256x128xf32>
    %c0_32 = arith.constant 0 : index
    %c0_33 = arith.constant 0 : index
    %42 = vector.load %arg4[%c0_32, %c0_33] : memref<1x128xf32, #tpu.memory_space<vmem>>, vector<1x128xf32>
    %43 = vector.broadcast %42 : vector<1x128xf32> to vector<256x128xf32>
    %44 = arith.addf %41, %43 : vector<256x128xf32>
    %cst_34 = arith.constant 0.000000e+00 : f32
    %45 = vector.broadcast %cst_34 : f32 to vector<256x128xf32>
    %46 = arith.maximumf %44, %45 : vector<256x128xf32>
    %47 = vector.shape_cast %46 : vector<256x128xf32> to vector<1x16x16x128xf32>
    %c0_35 = arith.constant 0 : index
    %c0_36 = arith.constant 0 : index
    %c0_37 = arith.constant 0 : index
    %c0_38 = arith.constant 0 : index
    %48 = vector.load %arg5[%c0_35, %c0_36, %c0_37, %c0_38] : memref<1x16x16x128xf32, #tpu.memory_space<vmem>>, vector<1x16x16x128xf32>
    tpu.vector_store %arg5[%c0_35, %c0_36, %c0_37, %c0_38], %47 {strides = array<i32>} : memref<1x16x16x128xf32, #tpu.memory_space<vmem>>, vector<1x16x16x128xf32>,
    return
  }
  func.func @transform_0(%arg0: i32, %arg1: i32) -> (i32, i32, i32, i32) {
    %c0_i32 = arith.constant 0 : i32
    %c0_i32_0 = arith.constant 0 : i32
    %c0_i32_1 = arith.constant 0 : i32
    %c0_i32_2 = arith.constant 0 : i32
    return %arg0, %c0_i32, %c0_i32_0, %c0_i32_1 : i32, i32, i32, i32
  }
  func.func @transform_1(%arg0: i32, %arg1: i32) -> (i32, i32) {
    %c0_i32 = arith.constant 0 : i32
    %c0_i32_0 = arith.constant 0 : i32
    %c0_i32_1 = arith.constant 0 : i32
    return %c0_i32, %c0_i32_0 : i32, i32
  }
  func.func @transform_2(%arg0: i32, %arg1: i32) -> (i32, i32) {
    %c0_i32 = arith.constant 0 : i32
    %c0_i32_0 = arith.constant 0 : i32
    %c0_i32_1 = arith.constant 0 : i32
    return %c0_i32, %c0_i32_0 : i32, i32
  }
  func.func @transform_3(%arg0: i32, %arg1: i32) -> (i32, i32, i32, i32) {
    %c0_i32 = arith.constant 0 : i32
    %c0_i32_0 = arith.constant 0 : i32
    %c0_i32_1 = arith.constant 0 : i32
    return %arg0, %arg1, %c0_i32, %c0_i32_0 : i32, i32, i32, i32
  }
}

</mosaic_0001>

<llo_original>
// kernel: basic_conv_forward.1
$region0: #{basic_conv_forward.1}
  #allocation0 [shape = 'u32[]', space=smem, size = 0x4, offset = 0x4, fixed_abs, tag = 'smem constant byte address 0x4 - core index']
  #allocation1 [shape = 'u32[144,128]{1,0:T(1,128)}', space=vmem, size = 0x12000, scoped, tag = 'internal scratch']
  %s0 = inlined_call_operand.vmem [shape: f32[2,18,18,4], index: 0, kind: input, shape index: {}]
  %s1 = inlined_call_operand.vmem [shape: f32[36,128], index: 1, kind: input, shape index: {}]
  %s2 = inlined_call_operand.vmem [shape: f32[1,128], index: 2, kind: input, shape index: {}]
  %s3 = inlined_call_operand.vmem [shape: f32[2,16,16,128], index: 3, kind: output, shape index: {}]
  %s4 = sld [smem:[#allocation0]]
  $region45: #{basic_conv_forward.1} parent=0
    _
  %s6 = ssub.s32 1, %s4
  %s7 = scalar_select 0, %s6, %s4
  loop: start=0, step=1, limit=4
  $region2: #{basic_conv_forward.1} parent=0 // loop_pre_header
    _
  $region3: #{basic_conv_forward.1} parent=0 // loop_header
    %s9 = sphi 0, %s13
    %p10 = scmp.ge.s32.totalorder %s9, 4
    %s16 = sphi 0, %s28
    %s17 = sphi 0, %s24
    %s18 = sphi 0, %s16
    %s19 = sphi 0, %s17
    %s20 = sphi 0, %s18
    %s21 = sphi 0, %s19
    %s31 = sphi 0, %s33
    %s34 = sphi 0, %s31
    %s35 = sphi 0, %s34
    %s51 = sphi 0, %s35
    %s55 = sphi 0, %s55
    %s57 = sphi 0, %s55
    %s58 = sphi 0, %s57
    %s72 = sphi 0, %s58
    %s76 = sphi 0, %s76
    %s78 = sphi 0, %s76
    %s79 = sphi 0, %s78
    %s93 = sphi 0, %s79
    %s101 = sphi 0, %s103
    %s104 = sphi 0, %s101
    %s105 = sphi 0, %s104
    %s121 = sphi 0, %s105
  $region4: #{basic_conv_forward.1} parent=0 // loop_header_branch
    %12 = sbr.rel (%p10) target = $region8
  $region5: #{basic_conv_forward.1} parent=0 // loop_body
    %s14 = ssub.s32 %s9, 1
    %s15 = ssub.s32 %s9, 2
    %s22 = sadd.s32 1, %s17
    %p23 = scmp.ge.s32.totalorder %s22, 1
    %s24 = scalar_select %p23, 0, %s22
    %s25 = sadd.s32 1, %s16
    %s26 = scalar_select %p23, %s25, %s16
    %p27 = scmp.ge.s32.totalorder %s26, 2
    %s28 = scalar_select %p27, 0, %s26
    %s29 = ssub.s32 %s16, %s28
    %p30 = scmp.eq.s32.totalorder %s29, 0
    %s32 = sadd.s32 %s31, 1
    %s33 = scalar_select %p30, %s31, %s32
    %p36 = pneg %p30
    %p37 = scmp.eq.s32.totalorder %s9, 1
    %p38 = por %p36, %p37
    %p39 = scmp.ne.s32.totalorder %s31, %s34
    %p40 = scmp.eq.s32.totalorder %s9, 0
    %p41 = por %p39, %p40
    %p42 = scmp.ne.s32.totalorder %s31, %s34
    %p43 = scmp.eq.s32.totalorder %s14, 1
    %p44 = por %p42, %p43
    %p45 = scmp.ne.s32.totalorder %s34, %s35
    %p46 = scmp.eq.s32.totalorder %s14, 0
    %p47 = por %p45, %p46
    %p48 = scmp.ne.s32.totalorder %s34, %s35
    %p49 = scmp.eq.s32.totalorder %s15, 1
    %p50 = por %p48, %p49
    %p52 = scmp.ne.s32.totalorder %s35, %s51
    %p53 = scmp.eq.s32.totalorder %s15, 0
    %p54 = por %p52, %p53
    %s56 = sadd.s32 %s55, 1
    %p59 = scmp.eq.s32.totalorder %s9, 1
    %p60 = scmp.ne.s32.totalorder %s55, %s57
    %p61 = scmp.eq.s32.totalorder %s9, 0
    %p62 = por %p60, %p61
    %p63 = scmp.ne.s32.totalorder %s55, %s57
    %p64 = scmp.eq.s32.totalorder %s14, 1
    %p65 = por %p63, %p64
    %p66 = scmp.ne.s32.totalorder %s57, %s58
    %p67 = scmp.eq.s32.totalorder %s14, 0
    %p68 = por %p66, %p67
    %p69 = scmp.ne.s32.totalorder %s57, %s58
    %p70 = scmp.eq.s32.totalorder %s15, 1
    %p71 = por %p69, %p70
    %p73 = scmp.ne.s32.totalorder %s58, %s72
    %p74 = scmp.eq.s32.totalorder %s15, 0
    %p75 = por %p73, %p74
    %s77 = sadd.s32 %s76, 1
    %p80 = scmp.eq.s32.totalorder %s9, 1
    %p81 = scmp.ne.s32.totalorder %s76, %s78
    %p82 = scmp.eq.s32.totalorder %s9, 0
    %p83 = por %p81, %p82
    %p84 = scmp.ne.s32.totalorder %s76, %s78
    %p85 = scmp.eq.s32.totalorder %s14, 1
    %p86 = por %p84, %p85
    %p87 = scmp.ne.s32.totalorder %s78, %s79
    %p88 = scmp.eq.s32.totalorder %s14, 0
    %p89 = por %p87, %p88
    %p90 = scmp.ne.s32.totalorder %s78, %s79
    %p91 = scmp.eq.s32.totalorder %s15, 1
    %p92 = por %p90, %p91
    %p94 = scmp.ne.s32.totalorder %s79, %s93
    %p95 = scmp.eq.s32.totalorder %s15, 0
    %p96 = por %p94, %p95
    %s97 = ssub.s32 %s16, %s28
    %s98 = ssub.s32 %s17, %s24
    %s99 = sor.u32 %s97, %s98
    %p100 = scmp.eq.s32.totalorder %s99, 0
    %s102 = sadd.s32 %s101, 1
    %s103 = scalar_select %p100, %s101, %s102
    %p106 = pneg %p100
    %p107 = scmp.eq.s32.totalorder %s9, 1
    %p108 = por %p106, %p107
    %p109 = scmp.ne.s32.totalorder %s101, %s104
    %p110 = scmp.eq.s32.totalorder %s9, 0
    %p111 = por %p109, %p110
    %p112 = scmp.ne.s32.totalorder %s101, %s104
    %p113 = scmp.eq.s32.totalorder %s14, 1
    %p114 = por %p112, %p113
    %p115 = scmp.ne.s32.totalorder %s104, %s105
    %p116 = scmp.eq.s32.totalorder %s14, 0
    %p117 = por %p115, %p116
    %p118 = scmp.ne.s32.totalorder %s104, %s105
    %p119 = scmp.eq.s32.totalorder %s15, 1
    %p120 = por %p118, %p119
    %p122 = scmp.ne.s32.totalorder %s105, %s121
    %p123 = scmp.eq.s32.totalorder %s15, 0
    %p124 = por %p122, %p123
    %p125 = scmp.le.s32.totalorder 1, %s9
    %p126 = scmp.lt.s32.totalorder %s9, 3
    %p127 = pnand %p125, %p126
    %p128 = pneg %p127
    // Predicated region
    $region9: #{basic_conv_forward.1} parent=5 // pred_check
      _
    $region10: #{basic_conv_forward.1} parent=5 // pred_check_branch
      %130 = sbr.rel (%p127) target = $region12
    $region11: #{basic_conv_forward.1} parent=5 // pred_region
      %s131 = ssub.s32 %s9, 1
      // Predicated region
      $region13: #{basic_conv_forward.1} parent=11 // pred_check
        %p132 = pneg %p68
      $region14: #{basic_conv_forward.1} parent=11 // pred_check_branch
        %134 = sbr.rel (%p132) target = $region16
      $region15: #{basic_conv_forward.1} parent=11 // pred_region
        _
      $region16: #{basic_conv_forward.1} parent=11 // pred_fallthru
        _
      // Predicated region
      $region17: #{basic_conv_forward.1} parent=11 // pred_check
        %p135 = pneg %p89
      $region18: #{basic_conv_forward.1} parent=11 // pred_check_branch
        %137 = sbr.rel (%p135) target = $region20
      $region19: #{basic_conv_forward.1} parent=11 // pred_region
        _
      $region20: #{basic_conv_forward.1} parent=11 // pred_fallthru
        _
    $region12: #{basic_conv_forward.1} parent=5 // pred_fallthru
      _
    %p138 = scmp.lt.s32.totalorder %s9, 2
    // Predicated region
    $region21: #{basic_conv_forward.1} parent=5 // pred_check
      %p139 = pneg %p138
    $region22: #{basic_conv_forward.1} parent=5 // pred_check_branch
      %141 = sbr.rel (%p139) target = $region24
    $region23: #{basic_conv_forward.1} parent=5 // pred_region
      // Predicated region
      $region25: #{basic_conv_forward.1} parent=23 // pred_check
        %p142 = pneg %p41
      $region26: #{basic_conv_forward.1} parent=23 // pred_check_branch
        %144 = sbr.rel (%p142) target = $region28
      $region27: #{basic_conv_forward.1} parent=23 // pred_region
        %p145 = scmp.lt.s32.totalorder %s16, 1
        %s146 = scalar_select %p145, %s16, 1
        %s147 = smul.addr %s146, 54
        %s148 = smul.addr %s147, 8
        %s149 = scalar_lea.vmem %s0, %s148
      $region28: #{basic_conv_forward.1} parent=23 // pred_fallthru
        _
    $region24: #{basic_conv_forward.1} parent=5 // pred_fallthru
      _
    %p150 = scmp.le.s32.totalorder 1, %s9
    %p151 = scmp.lt.s32.totalorder %s9, 3
    %p152 = pnand %p150, %p151
    %p153 = pneg %p152
    // Predicated region
    $region29: #{basic_conv_forward.1} parent=5 // pred_check
      _
    $region30: #{basic_conv_forward.1} parent=5 // pred_check_branch
      %155 = sbr.rel (%p152) target = $region32
    $region31: #{basic_conv_forward.1} parent=5 // pred_region
      %s156 = ssub.s32 %s9, 1
      %p157 = scmp.lt.s32.totalorder %s18, 1
      %s158 = scalar_select %p157, %s18, 1
      %s159 = smul.addr %s158, 54
      %s160 = smul.addr %s159, 8
      %s161 = scalar_lea.vmem %s0, %s160
      %p162 = pneg %p47
      %p163 = pneg %p44
      %p164 = pneg %p68
      %p165 = pneg %p65
      %p166 = pneg %p89
      %p167 = pneg %p86
      %p168 = pneg %p117
      %p169 = pneg %p114
      %s170 = smul.u32 16, %s19
      %p171 = scmp.lt.s32.totalorder %s18, 1
      %s172 = scalar_select %p171, %s18, 1
      %p173 = scmp.lt.s32.totalorder %s170, 15
      %s174 = scalar_select %p173, %s170, 15
      %s175 = smul.addr %s174, 2
      %s176 = smul.addr %s172, 32
      %s177 = sadd.s32 %s175, %s176
      %s178 = smul.addr %s177, 8
      %s179 = scalar_lea.vmem %s3, %s178
      %p180 = scmp.lt.s32.totalorder %s18, 1
      %s181 = scalar_select %p180, %s18, 1
      %s182 = smul.addr %s181, 54
      %s183 = smul.addr %s182, 8
      %s184 = scalar_lea.vmem %s0, %s183
      %s185 = smul.u32 16, %s19
      %p186 = scmp.lt.s32.totalorder %s18, 1
      %s187 = scalar_select %p186, %s18, 1
      %p188 = scmp.lt.s32.totalorder %s185, 15
      %s189 = scalar_select %p188, %s185, 15
      %s190 = smul.addr %s189, 2
      %s191 = smul.addr %s187, 32
      %s192 = sadd.s32 %s190, %s191
      %s193 = smul.addr %s192, 8
      %s194 = scalar_lea.vmem %s3, %s193
      %s195 = smul.u32 16, %s19
      %s196 = smul.u32 %s19, 16
      %s197 = smul.u32 %s196, 24
      %s198 = scalar_lea.vmem %s184, %s197
      %v199 = vld [vmem:[%s198] sm:$0xff]
      %v200 = vld [vmem:[%s198 + $0x8] sm:$0xff]
      %v201 = vld [vmem:[%s198 + $0x18] sm:$0xff]
      %v202 = vld [vmem:[%s198 + $0x20] sm:$0xff]
      %v203 = vld [vmem:[%s198 + $0x30] sm:$0xff]
      %v204 = vld [vmem:[%s198 + $0x38] sm:$0xff]
      %v205 = vld [vmem:[%s198 + $0x48] sm:$0xff]
      %v206 = vld [vmem:[%s198 + $0x50] sm:$0xff]
      %v207 = vld [vmem:[%s198 + $0x60] sm:$0xff]
      %v208 = vld [vmem:[%s198 + $0x68] sm:$0xff]
      %v209 = vld [vmem:[%s198 + $0x78] sm:$0xff]
      %v210 = vld [vmem:[%s198 + $0x80] sm:$0xff]
      %v211 = vld [vmem:[%s198 + $0x90] sm:$0xff]
      %v212 = vld [vmem:[%s198 + $0x98] sm:$0xff]
      %v213 = vld [vmem:[%s198 + $0xa8] sm:$0xff]
      %v214 = vld [vmem:[%s198 + $0xb0] sm:$0xff]
      %v215 = vld [vmem:[%s198 + $0xc0] sm:$0xff]
      %v216 = vld [vmem:[%s198 + $0xc8] sm:$0xff]
      %v217 = vld [vmem:[%s198 + $0xd8] sm:$0xff]
      %v218 = vld [vmem:[%s198 + $0xe0] sm:$0xff]
      %v219 = vld [vmem:[%s198 + $0xf0] sm:$0xff]
      %v220 = vld [vmem:[%s198 + $0xf8] sm:$0xff]
      %v221 = vld [vmem:[%s198 + $0x108] sm:$0xff]
      %v222 = vld [vmem:[%s198 + $0x110] sm:$0xff]
      %v223 = vld [vmem:[%s198 + $0x120] sm:$0xff]
      %v224 = vld [vmem:[%s198 + $0x128] sm:$0xff]
      %v225 = vld [vmem:[%s198 + $0x138] sm:$0xff]
      %v226 = vld [vmem:[%s198 + $0x140] sm:$0xff]
      %v227 = vld [vmem:[%s198 + $0x150] sm:$0xff]
      %v228 = vld [vmem:[%s198 + $0x158] sm:$0xff]
      %v229 = vld [vmem:[%s198 + $0x168] sm:$0xff]
      %v230 = vld [vmem:[%s198 + $0x170] sm:$0xff]
      %v231 = vld [vmem:[%s198 + $0x1] sm:$0xff]
      %v232 = vld [vmem:[%s198 + $0x9] sm:$0xff]
      %v233 = vld [vmem:[%s198 + $0x19] sm:$0xff]
      %v234 = vld [vmem:[%s198 + $0x21] sm:$0xff]
      %v235 = vld [vmem:[%s198 + $0x31] sm:$0xff]
      %v236 = vld [vmem:[%s198 + $0x39] sm:$0xff]
      %v237 = vld [vmem:[%s198 + $0x49] sm:$0xff]
      %v238 = vld [vmem:[%s198 + $0x51] sm:$0xff]
      %v239 = vld [vmem:[%s198 + $0x61] sm:$0xff]
      %v240 = vld [vmem:[%s198 + $0x69] sm:$0xff]
      %v241 = vld [vmem:[%s198 + $0x79] sm:$0xff]
      %v242 = vld [vmem:[%s198 + $0x81] sm:$0xff]
      %v243 = vld [vmem:[%s198 + $0x91] sm:$0xff]
      %v244 = vld [vmem:[%s198 + $0x99] sm:$0xff]
      %v245 = vld [vmem:[%s198 + $0xa9] sm:$0xff]
      %v246 = vld [vmem:[%s198 + $0xb1] sm:$0xff]
      %v247 = vld [vmem:[%s198 + $0xc1] sm:$0xff]
      %v248 = vld [vmem:[%s198 + $0xc9] sm:$0xff]
      %v249 = vld [vmem:[%s198 + $0xd9] sm:$0xff]
      %v250 = vld [vmem:[%s198 + $0xe1] sm:$0xff]
      %v251 = vld [vmem:[%s198 + $0xf1] sm:$0xff]
      %v252 = vld [vmem:[%s198 + $0xf9] sm:$0xff]
      %v253 = vld [vmem:[%s198 + $0x109] sm:$0xff]
      %v254 = vld [vmem:[%s198 + $0x111] sm:$0xff]
      %v255 = vld [vmem:[%s198 + $0x121] sm:$0xff]
      %v256 = vld [vmem:[%s198 + $0x129] sm:$0xff]
      %v257 = vld [vmem:[%s198 + $0x139] sm:$0xff]
      %v258 = vld [vmem:[%s198 + $0x141] sm:$0xff]
      %v259 = vld [vmem:[%s198 + $0x151] sm:$0xff]
      %v260 = vld [vmem:[%s198 + $0x159] sm:$0xff]
      %v261 = vld [vmem:[%s198 + $0x169] sm:$0xff]
      %v262 = vld [vmem:[%s198 + $0x171] sm:$0xff]
      %v263 = vld [vmem:[%s198 + $0x2] sm:$0xff]
      %v264 = vld [vmem:[%s198 + $0xa] sm:$0xff]
      %v265 = vld [vmem:[%s198 + $0x1a] sm:$0xff]
      %v266 = vld [vmem:[%s198 + $0x22] sm:$0xff]
      %v267 = vld [vmem:[%s198 + $0x32] sm:$0xff]
      %v268 = vld [vmem:[%s198 + $0x3a] sm:$0xff]
      %v269 = vld [vmem:[%s198 + $0x4a] sm:$0xff]
      %v270 = vld [vmem:[%s198 + $0x52] sm:$0xff]
      %v271 = vld [vmem:[%s198 + $0x62] sm:$0xff]
      %v272 = vld [vmem:[%s198 + $0x6a] sm:$0xff]
      %v273 = vld [vmem:[%s198 + $0x7a] sm:$0xff]
      %v274 = vld [vmem:[%s198 + $0x82] sm:$0xff]
      %v275 = vld [vmem:[%s198 + $0x92] sm:$0xff]
      %v276 = vld [vmem:[%s198 + $0x9a] sm:$0xff]
      %v277 = vld [vmem:[%s198 + $0xaa] sm:$0xff]
      %v278 = vld [vmem:[%s198 + $0xb2] sm:$0xff]
      %v279 = vld [vmem:[%s198 + $0xc2] sm:$0xff]
      %v280 = vld [vmem:[%s198 + $0xca] sm:$0xff]
      %v281 = vld [vmem:[%s198 + $0xda] sm:$0xff]
      %v282 = vld [vmem:[%s198 + $0xe2] sm:$0xff]
      %v283 = vld [vmem:[%s198 + $0xf2] sm:$0xff]
      %v284 = vld [vmem:[%s198 + $0xfa] sm:$0xff]
      %v285 = vld [vmem:[%s198 + $0x10a] sm:$0xff]
      %v286 = vld [vmem:[%s198 + $0x112] sm:$0xff]
      %v287 = vld [vmem:[%s198 + $0x122] sm:$0xff]
      %v288 = vld [vmem:[%s198 + $0x12a] sm:$0xff]
      %v289 = vld [vmem:[%s198 + $0x13a] sm:$0xff]
      %v290 = vld [vmem:[%s198 + $0x142] sm:$0xff]
      %v291 = vld [vmem:[%s198 + $0x152] sm:$0xff]
      %v292 = vld [vmem:[%s198 + $0x15a] sm:$0xff]
      %v293 = vld [vmem:[%s198 + $0x16a] sm:$0xff]
      %v294 = vld [vmem:[%s198 + $0x172] sm:$0xff]
      %s295 = sadd.s32 %s196, 1
      %s296 = smul.u32 %s295, 24
      %s297 = scalar_lea.vmem %s184, %s296
      %v298 = vld [vmem:[%s297] sm:$0xff]
      %v299 = vld [vmem:[%s297 + $0x8] sm:$0xff]
      %v300 = vld [vmem:[%s297 + $0x18] sm:$0xff]
      %v301 = vld [vmem:[%s297 + $0x20] sm:$0xff]
      %v302 = vld [vmem:[%s297 + $0x30] sm:$0xff]
      %v303 = vld [vmem:[%s297 + $0x38] sm:$0xff]
      %v304 = vld [vmem:[%s297 + $0x48] sm:$0xff]
      %v305 = vld [vmem:[%s297 + $0x50] sm:$0xff]
      %v306 = vld [vmem:[%s297 + $0x60] sm:$0xff]
      %v307 = vld [vmem:[%s297 + $0x68] sm:$0xff]
      %v308 = vld [vmem:[%s297 + $0x78] sm:$0xff]
      %v309 = vld [vmem:[%s297 + $0x80] sm:$0xff]
      %v310 = vld [vmem:[%s297 + $0x90] sm:$0xff]
      %v311 = vld [vmem:[%s297 + $0x98] sm:$0xff]
      %v312 = vld [vmem:[%s297 + $0xa8] sm:$0xff]
      %v313 = vld [vmem:[%s297 + $0xb0] sm:$0xff]
      %v314 = vld [vmem:[%s297 + $0xc0] sm:$0xff]
      %v315 = vld [vmem:[%s297 + $0xc8] sm:$0xff]
      %v316 = vld [vmem:[%s297 + $0xd8] sm:$0xff]
      %v317 = vld [vmem:[%s297 + $0xe0] sm:$0xff]
      %v318 = vld [vmem:[%s297 + $0xf0] sm:$0xff]
      %v319 = vld [vmem:[%s297 + $0xf8] sm:$0xff]
      %v320 = vld [vmem:[%s297 + $0x108] sm:$0xff]
      %v321 = vld [vmem:[%s297 + $0x110] sm:$0xff]
      %v322 = vld [vmem:[%s297 + $0x120] sm:$0xff]
      %v323 = vld [vmem:[%s297 + $0x128] sm:$0xff]
      %v324 = vld [vmem:[%s297 + $0x138] sm:$0xff]
      %v325 = vld [vmem:[%s297 + $0x140] sm:$0xff]
      %v326 = vld [vmem:[%s297 + $0x150] sm:$0xff]
      %v327 = vld [vmem:[%s297 + $0x158] sm:$0xff]
      %v328 = vld [vmem:[%s297 + $0x168] sm:$0xff]
      %v329 = vld [vmem:[%s297 + $0x170] sm:$0xff]
      %v330 = vld [vmem:[%s297 + $0x1] sm:$0xff]
      %v331 = vld [vmem:[%s297 + $0x9] sm:$0xff]
      %v332 = vld [vmem:[%s297 + $0x19] sm:$0xff]
      %v333 = vld [vmem:[%s297 + $0x21] sm:$0xff]
      %v334 = vld [vmem:[%s297 + $0x31] sm:$0xff]
      %v335 = vld [vmem:[%s297 + $0x39] sm:$0xff]
      %v336 = vld [vmem:[%s297 + $0x49] sm:$0xff]
      %v337 = vld [vmem:[%s297 + $0x51] sm:$0xff]
      %v338 = vld [vmem:[%s297 + $0x61] sm:$0xff]
      %v339 = vld [vmem:[%s297 + $0x69] sm:$0xff]
      %v340 = vld [vmem:[%s297 + $0x79] sm:$0xff]
      %v341 = vld [vmem:[%s297 + $0x81] sm:$0xff]
      %v342 = vld [vmem:[%s297 + $0x91] sm:$0xff]
      %v343 = vld [vmem:[%s297 + $0x99] sm:$0xff]
      %v344 = vld [vmem:[%s297 + $0xa9] sm:$0xff]
      %v345 = vld [vmem:[%s297 + $0xb1] sm:$0xff]
      %v346 = vld [vmem:[%s297 + $0xc1] sm:$0xff]
      %v347 = vld [vmem:[%s297 + $0xc9] sm:$0xff]
      %v348 = vld [vmem:[%s297 + $0xd9] sm:$0xff]
      %v349 = vld [vmem:[%s297 + $0xe1] sm:$0xff]
      %v350 = vld [vmem:[%s297 + $0xf1] sm:$0xff]
      %v351 = vld [vmem:[%s297 + $0xf9] sm:$0xff]
      %v352 = vld [vmem:[%s297 + $0x109] sm:$0xff]
      %v353 = vld [vmem:[%s297 + $0x111] sm:$0xff]
      %v354 = vld [vmem:[%s297 + $0x121] sm:$0xff]
      %v355 = vld [vmem:[%s297 + $0x129] sm:$0xff]
      %v356 = vld [vmem:[%s297 + $0x139] sm:$0xff]
      %v357 = vld [vmem:[%s297 + $0x141] sm:$0xff]
      %v358 = vld [vmem:[%s297 + $0x151] sm:$0xff]
      %v359 = vld [vmem:[%s297 + $0x159] sm:$0xff]
      %v360 = vld [vmem:[%s297 + $0x169] sm:$0xff]
      %v361 = vld [vmem:[%s297 + $0x171] sm:$0xff]
      %v362 = vld [vmem:[%s297 + $0x2] sm:$0xff]
      %v363 = vld [vmem:[%s297 + $0xa] sm:$0xff]
      %v364 = vld [vmem:[%s297 + $0x1a] sm:$0xff]
      %v365 = vld [vmem:[%s297 + $0x22] sm:$0xff]
      %v366 = vld [vmem:[%s297 + $0x32] sm:$0xff]
      %v367 = vld [vmem:[%s297 + $0x3a] sm:$0xff]
      %v368 = vld [vmem:[%s297 + $0x4a] sm:$0xff]
      %v369 = vld [vmem:[%s297 + $0x52] sm:$0xff]
      %v370 = vld [vmem:[%s297 + $0x62] sm:$0xff]
      %v371 = vld [vmem:[%s297 + $0x6a] sm:$0xff]
      %v372 = vld [vmem:[%s297 + $0x7a] sm:$0xff]
      %v373 = vld [vmem:[%s297 + $0x82] sm:$0xff]
      %v374 = vld [vmem:[%s297 + $0x92] sm:$0xff]
      %v375 = vld [vmem:[%s297 + $0x9a] sm:$0xff]
      %v376 = vld [vmem:[%s297 + $0xaa] sm:$0xff]
      %v377 = vld [vmem:[%s297 + $0xb2] sm:$0xff]
      %v378 = vld [vmem:[%s297 + $0xc2] sm:$0xff]
      %v379 = vld [vmem:[%s297 + $0xca] sm:$0xff]
      %v380 = vld [vmem:[%s297 + $0xda] sm:$0xff]
      %v381 = vld [vmem:[%s297 + $0xe2] sm:$0xff]
      %v382 = vld [vmem:[%s297 + $0xf2] sm:$0xff]
      %v383 = vld [vmem:[%s297 + $0xfa] sm:$0xff]
      %v384 = vld [vmem:[%s297 + $0x10a] sm:$0xff]
      %v385 = vld [vmem:[%s297 + $0x112] sm:$0xff]
      %v386 = vld [vmem:[%s297 + $0x122] sm:$0xff]
      %v387 = vld [vmem:[%s297 + $0x12a] sm:$0xff]
      %v388 = vld [vmem:[%s297 + $0x13a] sm:$0xff]
      %v389 = vld [vmem:[%s297 + $0x142] sm:$0xff]
      %v390 = vld [vmem:[%s297 + $0x152] sm:$0xff]
      %v391 = vld [vmem:[%s297 + $0x15a] sm:$0xff]
      %v392 = vld [vmem:[%s297 + $0x16a] sm:$0xff]
      %v393 = vld [vmem:[%s297 + $0x172] sm:$0xff]
      %s394 = sadd.s32 %s196, 2
      %s395 = smul.u32 %s394, 24
      %s396 = scalar_lea.vmem %s184, %s395
      %v397 = vld [vmem:[%s396] sm:$0xff]
      %v398 = vld [vmem:[%s396 + $0x8] sm:$0xff]
      %v399 = vld [vmem:[%s396 + $0x18] sm:$0xff]
      %v400 = vld [vmem:[%s396 + $0x20] sm:$0xff]
      %v401 = vld [vmem:[%s396 + $0x30] sm:$0xff]
      %v402 = vld [vmem:[%s396 + $0x38] sm:$0xff]
      %v403 = vld [vmem:[%s396 + $0x48] sm:$0xff]
      %v404 = vld [vmem:[%s396 + $0x50] sm:$0xff]
      %v405 = vld [vmem:[%s396 + $0x60] sm:$0xff]
      %v406 = vld [vmem:[%s396 + $0x68] sm:$0xff]
      %v407 = vld [vmem:[%s396 + $0x78] sm:$0xff]
      %v408 = vld [vmem:[%s396 + $0x80] sm:$0xff]
      %v409 = vld [vmem:[%s396 + $0x90] sm:$0xff]
      %v410 = vld [vmem:[%s396 + $0x98] sm:$0xff]
      %v411 = vld [vmem:[%s396 + $0xa8] sm:$0xff]
      %v412 = vld [vmem:[%s396 + $0xb0] sm:$0xff]
      %v413 = vld [vmem:[%s396 + $0xc0] sm:$0xff]
      %v414 = vld [vmem:[%s396 + $0xc8] sm:$0xff]
      %v415 = vld [vmem:[%s396 + $0xd8] sm:$0xff]
      %v416 = vld [vmem:[%s396 + $0xe0] sm:$0xff]
      %v417 = vld [vmem:[%s396 + $0xf0] sm:$0xff]
      %v418 = vld [vmem:[%s396 + $0xf8] sm:$0xff]
      %v419 = vld [vmem:[%s396 + $0x108] sm:$0xff]
      %v420 = vld [vmem:[%s396 + $0x110] sm:$0xff]
      %v421 = vld [vmem:[%s396 + $0x120] sm:$0xff]
      %v422 = vld [vmem:[%s396 + $0x128] sm:$0xff]
      %v423 = vld [vmem:[%s396 + $0x138] sm:$0xff]
      %v424 = vld [vmem:[%s396 + $0x140] sm:$0xff]
      %v425 = vld [vmem:[%s396 + $0x150] sm:$0xff]
      %v426 = vld [vmem:[%s396 + $0x158] sm:$0xff]
      %v427 = vld [vmem:[%s396 + $0x168] sm:$0xff]
      %v428 = vld [vmem:[%s396 + $0x170] sm:$0xff]
      %v429 = vld [vmem:[%s396 + $0x1] sm:$0xff]
      %v430 = vld [vmem:[%s396 + $0x9] sm:$0xff]
      %v431 = vld [vmem:[%s396 + $0x19] sm:$0xff]
      %v432 = vld [vmem:[%s396 + $0x21] sm:$0xff]
      %v433 = vld [vmem:[%s396 + $0x31] sm:$0xff]
      %v434 = vld [vmem:[%s396 + $0x39] sm:$0xff]
      %v435 = vld [vmem:[%s396 + $0x49] sm:$0xff]
      %v436 = vld [vmem:[%s396 + $0x51] sm:$0xff]
      %v437 = vld [vmem:[%s396 + $0x61] sm:$0xff]
      %v438 = vld [vmem:[%s396 + $0x69] sm:$0xff]
      %v439 = vld [vmem:[%s396 + $0x79] sm:$0xff]
      %v440 = vld [vmem:[%s396 + $0x81] sm:$0xff]
      %v441 = vld [vmem:[%s396 + $0x91] sm:$0xff]
      %v442 = vld [vmem:[%s396 + $0x99] sm:$0xff]
      %v443 = vld [vmem:[%s396 + $0xa9] sm:$0xff]
      %v444 = vld [vmem:[%s396 + $0xb1] sm:$0xff]
      %v445 = vld [vmem:[%s396 + $0xc1] sm:$0xff]
      %v446 = vld [vmem:[%s396 + $0xc9] sm:$0xff]
      %v447 = vld [vmem:[%s396 + $0xd9] sm:$0xff]
      %v448 = vld [vmem:[%s396 + $0xe1] sm:$0xff]
      %v449 = vld [vmem:[%s396 + $0xf1] sm:$0xff]
      %v450 = vld [vmem:[%s396 + $0xf9] sm:$0xff]
      %v451 = vld [vmem:[%s396 + $0x109] sm:$0xff]
      %v452 = vld [vmem:[%s396 + $0x111] sm:$0xff]
      %v453 = vld [vmem:[%s396 + $0x121] sm:$0xff]
      %v454 = vld [vmem:[%s396 + $0x129] sm:$0xff]
      %v455 = vld [vmem:[%s396 + $0x139] sm:$0xff]
      %v456 = vld [vmem:[%s396 + $0x141] sm:$0xff]
      %v457 = vld [vmem:[%s396 + $0x151] sm:$0xff]
      %v458 = vld [vmem:[%s396 + $0x159] sm:$0xff]
      %v459 = vld [vmem:[%s396 + $0x169] sm:$0xff]
      %v460 = vld [vmem:[%s396 + $0x171] sm:$0xff]
      %v461 = vld [vmem:[%s396 + $0x2] sm:$0xff]
      %v462 = vld [vmem:[%s396 + $0xa] sm:$0xff]
      %v463 = vld [vmem:[%s396 + $0x1a] sm:$0xff]
      %v464 = vld [vmem:[%s396 + $0x22] sm:$0xff]
      %v465 = vld [vmem:[%s396 + $0x32] sm:$0xff]
      %v466 = vld [vmem:[%s396 + $0x3a] sm:$0xff]
      %v467 = vld [vmem:[%s396 + $0x4a] sm:$0xff]
      %v468 = vld [vmem:[%s396 + $0x52] sm:$0xff]
      %v469 = vld [vmem:[%s396 + $0x62] sm:$0xff]
      %v470 = vld [vmem:[%s396 + $0x6a] sm:$0xff]
      %v471 = vld [vmem:[%s396 + $0x7a] sm:$0xff]
      %v472 = vld [vmem:[%s396 + $0x82] sm:$0xff]
      %v473 = vld [vmem:[%s396 + $0x92] sm:$0xff]
      %v474 = vld [vmem:[%s396 + $0x9a] sm:$0xff]
      %v475 = vld [vmem:[%s396 + $0xaa] sm:$0xff]
      %v476 = vld [vmem:[%s396 + $0xb2] sm:$0xff]
      %v477 = vld [vmem:[%s396 + $0xc2] sm:$0xff]
      %v478 = vld [vmem:[%s396 + $0xca] sm:$0xff]
      %v479 = vld [vmem:[%s396 + $0xda] sm:$0xff]
      %v480 = vld [vmem:[%s396 + $0xe2] sm:$0xff]
      %v481 = vld [vmem:[%s396 + $0xf2] sm:$0xff]
      %v482 = vld [vmem:[%s396 + $0xfa] sm:$0xff]
      %v483 = vld [vmem:[%s396 + $0x10a] sm:$0xff]
      %v484 = vld [vmem:[%s396 + $0x112] sm:$0xff]
      %v485 = vld [vmem:[%s396 + $0x122] sm:$0xff]
      %v486 = vld [vmem:[%s396 + $0x12a] sm:$0xff]
      %v487 = vld [vmem:[%s396 + $0x13a] sm:$0xff]
      %v488 = vld [vmem:[%s396 + $0x142] sm:$0xff]
      %v489 = vld [vmem:[%s396 + $0x152] sm:$0xff]
      %v490 = vld [vmem:[%s396 + $0x15a] sm:$0xff]
      %v491 = vld [vmem:[%s396 + $0x16a] sm:$0xff]
      %v492 = vld [vmem:[%s396 + $0x172] sm:$0xff]
      %525 = vrot.lane.b32.xlu0 %v231, 4
      %v526 = vpop.permute.xlu0 %525
      %527 = vrot.lane.b32.xlu0 %v232, 4
      %v528 = vpop.permute.xlu0 %527
      %529 = vrot.lane.b32.xlu0 %v233, 4
      %v530 = vpop.permute.xlu0 %529
      %531 = vrot.lane.b32.xlu0 %v234, 4
      %v532 = vpop.permute.xlu0 %531
      %533 = vrot.lane.b32.xlu0 %v235, 4
      %v534 = vpop.permute.xlu0 %533
      %535 = vrot.lane.b32.xlu0 %v236, 4
      %v536 = vpop.permute.xlu0 %535
      %537 = vrot.lane.b32.xlu0 %v237, 4
      %v538 = vpop.permute.xlu0 %537
      %539 = vrot.lane.b32.xlu0 %v238, 4
      %v540 = vpop.permute.xlu0 %539
      %541 = vrot.lane.b32.xlu0 %v239, 4
      %v542 = vpop.permute.xlu0 %541
      %543 = vrot.lane.b32.xlu0 %v240, 4
      %v544 = vpop.permute.xlu0 %543
      %545 = vrot.lane.b32.xlu0 %v241, 4
      %v546 = vpop.permute.xlu0 %545
      %547 = vrot.lane.b32.xlu0 %v242, 4
      %v548 = vpop.permute.xlu0 %547
      %549 = vrot.lane.b32.xlu0 %v243, 4
      %v550 = vpop.permute.xlu0 %549
      %551 = vrot.lane.b32.xlu0 %v244, 4
      %v552 = vpop.permute.xlu0 %551
      %553 = vrot.lane.b32.xlu0 %v245, 4
      %v554 = vpop.permute.xlu0 %553
      %555 = vrot.lane.b32.xlu0 %v246, 4
      %v556 = vpop.permute.xlu0 %555
      %557 = vrot.lane.b32.xlu0 %v247, 4
      %v558 = vpop.permute.xlu0 %557
      %559 = vrot.lane.b32.xlu0 %v248, 4
      %v560 = vpop.permute.xlu0 %559
      %561 = vrot.lane.b32.xlu0 %v249, 4
      %v562 = vpop.permute.xlu0 %561
      %563 = vrot.lane.b32.xlu0 %v250, 4
      %v564 = vpop.permute.xlu0 %563
      %565 = vrot.lane.b32.xlu0 %v251, 4
      %v566 = vpop.permute.xlu0 %565
      %567 = vrot.lane.b32.xlu0 %v252, 4
      %v568 = vpop.permute.xlu0 %567
      %569 = vrot.lane.b32.xlu0 %v253, 4
      %v570 = vpop.permute.xlu0 %569
      %571 = vrot.lane.b32.xlu0 %v254, 4
      %v572 = vpop.permute.xlu0 %571
      %573 = vrot.lane.b32.xlu0 %v255, 4
      %v574 = vpop.permute.xlu0 %573
      %575 = vrot.lane.b32.xlu0 %v256, 4
      %v576 = vpop.permute.xlu0 %575
      %577 = vrot.lane.b32.xlu0 %v257, 4
      %v578 = vpop.permute.xlu0 %577
      %579 = vrot.lane.b32.xlu0 %v258, 4
      %v580 = vpop.permute.xlu0 %579
      %581 = vrot.lane.b32.xlu0 %v259, 4
      %v582 = vpop.permute.xlu0 %581
      %583 = vrot.lane.b32.xlu0 %v260, 4
      %v584 = vpop.permute.xlu0 %583
      %585 = vrot.lane.b32.xlu0 %v261, 4
      %v586 = vpop.permute.xlu0 %585
      %587 = vrot.lane.b32.xlu0 %v262, 4
      %v588 = vpop.permute.xlu0 %587
      %653 = vrot.lane.b32.xlu0 %v263, 8
      %v654 = vpop.permute.xlu0 %653
      %655 = vrot.lane.b32.xlu0 %v264, 8
      %v656 = vpop.permute.xlu0 %655
      %657 = vrot.lane.b32.xlu0 %v265, 8
      %v658 = vpop.permute.xlu0 %657
      %659 = vrot.lane.b32.xlu0 %v266, 8
      %v660 = vpop.permute.xlu0 %659
      %661 = vrot.lane.b32.xlu0 %v267, 8
      %v662 = vpop.permute.xlu0 %661
      %663 = vrot.lane.b32.xlu0 %v268, 8
      %v664 = vpop.permute.xlu0 %663
      %665 = vrot.lane.b32.xlu0 %v269, 8
      %v666 = vpop.permute.xlu0 %665
      %667 = vrot.lane.b32.xlu0 %v270, 8
      %v668 = vpop.permute.xlu0 %667
      %669 = vrot.lane.b32.xlu0 %v271, 8
      %v670 = vpop.permute.xlu0 %669
      %671 = vrot.lane.b32.xlu0 %v272, 8
      %v672 = vpop.permute.xlu0 %671
      %673 = vrot.lane.b32.xlu0 %v273, 8
      %v674 = vpop.permute.xlu0 %673
      %675 = vrot.lane.b32.xlu0 %v274, 8
      %v676 = vpop.permute.xlu0 %675
      %677 = vrot.lane.b32.xlu0 %v275, 8
      %v678 = vpop.permute.xlu0 %677
      %679 = vrot.lane.b32.xlu0 %v276, 8
      %v680 = vpop.permute.xlu0 %679
      %681 = vrot.lane.b32.xlu0 %v277, 8
      %v682 = vpop.permute.xlu0 %681
      %683 = vrot.lane.b32.xlu0 %v278, 8
      %v684 = vpop.permute.xlu0 %683
      %685 = vrot.lane.b32.xlu0 %v279, 8
      %v686 = vpop.permute.xlu0 %685
      %687 = vrot.lane.b32.xlu0 %v280, 8
      %v688 = vpop.permute.xlu0 %687
      %689 = vrot.lane.b32.xlu0 %v281, 8
      %v690 = vpop.permute.xlu0 %689
      %691 = vrot.lane.b32.xlu0 %v282, 8
      %v692 = vpop.permute.xlu0 %691
      %693 = vrot.lane.b32.xlu0 %v283, 8
      %v694 = vpop.permute.xlu0 %693
      %695 = vrot.lane.b32.xlu0 %v284, 8
      %v696 = vpop.permute.xlu0 %695
      %697 = vrot.lane.b32.xlu0 %v285, 8
      %v698 = vpop.permute.xlu0 %697
      %699 = vrot.lane.b32.xlu0 %v286, 8
      %v700 = vpop.permute.xlu0 %699
      %701 = vrot.lane.b32.xlu0 %v287, 8
      %v702 = vpop.permute.xlu0 %701
      %703 = vrot.lane.b32.xlu0 %v288, 8
      %v704 = vpop.permute.xlu0 %703
      %705 = vrot.lane.b32.xlu0 %v289, 8
      %v706 = vpop.permute.xlu0 %705
      %707 = vrot.lane.b32.xlu0 %v290, 8
      %v708 = vpop.permute.xlu0 %707
      %709 = vrot.lane.b32.xlu0 %v291, 8
      %v710 = vpop.permute.xlu0 %709
      %711 = vrot.lane.b32.xlu0 %v292, 8
      %v712 = vpop.permute.xlu0 %711
      %713 = vrot.lane.b32.xlu0 %v293, 8
      %v714 = vpop.permute.xlu0 %713
      %715 = vrot.lane.b32.xlu0 %v294, 8
      %v716 = vpop.permute.xlu0 %715
      %781 = vrot.lane.b32.xlu0 %v298, 12
      %v782 = vpop.permute.xlu0 %781
      %783 = vrot.lane.b32.xlu0 %v299, 12
      %v784 = vpop.permute.xlu0 %783
      %785 = vrot.lane.b32.xlu0 %v300, 12
      %v786 = vpop.permute.xlu0 %785
      %787 = vrot.lane.b32.xlu0 %v301, 12
      %v788 = vpop.permute.xlu0 %787
      %789 = vrot.lane.b32.xlu0 %v302, 12
      %v790 = vpop.permute.xlu0 %789
      %791 = vrot.lane.b32.xlu0 %v303, 12
      %v792 = vpop.permute.xlu0 %791
      %793 = vrot.lane.b32.xlu0 %v304, 12
      %v794 = vpop.permute.xlu0 %793
      %795 = vrot.lane.b32.xlu0 %v305, 12
      %v796 = vpop.permute.xlu0 %795
      %797 = vrot.lane.b32.xlu0 %v306, 12
      %v798 = vpop.permute.xlu0 %797
      %799 = vrot.lane.b32.xlu0 %v307, 12
      %v800 = vpop.permute.xlu0 %799
      %801 = vrot.lane.b32.xlu0 %v308, 12
      %v802 = vpop.permute.xlu0 %801
      %803 = vrot.lane.b32.xlu0 %v309, 12
      %v804 = vpop.permute.xlu0 %803
      %805 = vrot.lane.b32.xlu0 %v310, 12
      %v806 = vpop.permute.xlu0 %805
      %807 = vrot.lane.b32.xlu0 %v311, 12
      %v808 = vpop.permute.xlu0 %807
      %809 = vrot.lane.b32.xlu0 %v312, 12
      %v810 = vpop.permute.xlu0 %809
      %811 = vrot.lane.b32.xlu0 %v313, 12
      %v812 = vpop.permute.xlu0 %811
      %813 = vrot.lane.b32.xlu0 %v314, 12
      %v814 = vpop.permute.xlu0 %813
      %815 = vrot.lane.b32.xlu0 %v315, 12
      %v816 = vpop.permute.xlu0 %815
      %817 = vrot.lane.b32.xlu0 %v316, 12
      %v818 = vpop.permute.xlu0 %817
      %819 = vrot.lane.b32.xlu0 %v317, 12
      %v820 = vpop.permute.xlu0 %819
      %821 = vrot.lane.b32.xlu0 %v318, 12
      %v822 = vpop.permute.xlu0 %821
      %823 = vrot.lane.b32.xlu0 %v319, 12
      %v824 = vpop.permute.xlu0 %823
      %825 = vrot.lane.b32.xlu0 %v320, 12
      %v826 = vpop.permute.xlu0 %825
      %827 = vrot.lane.b32.xlu0 %v321, 12
      %v828 = vpop.permute.xlu0 %827
      %829 = vrot.lane.b32.xlu0 %v322, 12
      %v830 = vpop.permute.xlu0 %829
      %831 = vrot.lane.b32.xlu0 %v323, 12
      %v832 = vpop.permute.xlu0 %831
      %833 = vrot.lane.b32.xlu0 %v324, 12
      %v834 = vpop.permute.xlu0 %833
      %835 = vrot.lane.b32.xlu0 %v325, 12
      %v836 = vpop.permute.xlu0 %835
      %837 = vrot.lane.b32.xlu0 %v326, 12
      %v838 = vpop.permute.xlu0 %837
      %839 = vrot.lane.b32.xlu0 %v327, 12
      %v840 = vpop.permute.xlu0 %839
      %841 = vrot.lane.b32.xlu0 %v328, 12
      %v842 = vpop.permute.xlu0 %841
      %843 = vrot.lane.b32.xlu0 %v329, 12
      %v844 = vpop.permute.xlu0 %843
      %909 = vrot.lane.b32.xlu0 %v330, 16
      %v910 = vpop.permute.xlu0 %909
      %911 = vrot.lane.b32.xlu0 %v331, 16
      %v912 = vpop.permute.xlu0 %911
      %913 = vrot.lane.b32.xlu0 %v332, 16
      %v914 = vpop.permute.xlu0 %913
      %915 = vrot.lane.b32.xlu0 %v333, 16
      %v916 = vpop.permute.xlu0 %915
      %917 = vrot.lane.b32.xlu0 %v334, 16
      %v918 = vpop.permute.xlu0 %917
      %919 = vrot.lane.b32.xlu0 %v335, 16
      %v920 = vpop.permute.xlu0 %919
      %921 = vrot.lane.b32.xlu0 %v336, 16
      %v922 = vpop.permute.xlu0 %921
      %923 = vrot.lane.b32.xlu0 %v337, 16
      %v924 = vpop.permute.xlu0 %923
      %925 = vrot.lane.b32.xlu0 %v338, 16
      %v926 = vpop.permute.xlu0 %925
      %927 = vrot.lane.b32.xlu0 %v339, 16
      %v928 = vpop.permute.xlu0 %927
      %929 = vrot.lane.b32.xlu0 %v340, 16
      %v930 = vpop.permute.xlu0 %929
      %931 = vrot.lane.b32.xlu0 %v341, 16
      %v932 = vpop.permute.xlu0 %931
      %933 = vrot.lane.b32.xlu0 %v342, 16
      %v934 = vpop.permute.xlu0 %933
      %935 = vrot.lane.b32.xlu0 %v343, 16
      %v936 = vpop.permute.xlu0 %935
      %937 = vrot.lane.b32.xlu0 %v344, 16
      %v938 = vpop.permute.xlu0 %937
      %939 = vrot.lane.b32.xlu0 %v345, 16
      %v940 = vpop.permute.xlu0 %939
      %941 = vrot.lane.b32.xlu0 %v346, 16
      %v942 = vpop.permute.xlu0 %941
      %943 = vrot.lane.b32.xlu0 %v347, 16
      %v944 = vpop.permute.xlu0 %943
      %945 = vrot.lane.b32.xlu0 %v348, 16
      %v946 = vpop.permute.xlu0 %945
      %947 = vrot.lane.b32.xlu0 %v349, 16
      %v948 = vpop.permute.xlu0 %947
      %949 = vrot.lane.b32.xlu0 %v350, 16
      %v950 = vpop.permute.xlu0 %949
      %951 = vrot.lane.b32.xlu0 %v351, 16
      %v952 = vpop.permute.xlu0 %951
      %953 = vrot.lane.b32.xlu0 %v352, 16
      %v954 = vpop.permute.xlu0 %953
      %955 = vrot.lane.b32.xlu0 %v353, 16
      %v956 = vpop.permute.xlu0 %955
      %957 = vrot.lane.b32.xlu0 %v354, 16
      %v958 = vpop.permute.xlu0 %957
      %959 = vrot.lane.b32.xlu0 %v355, 16
      %v960 = vpop.permute.xlu0 %959
      %961 = vrot.lane.b32.xlu0 %v356, 16
      %v962 = vpop.permute.xlu0 %961
      %963 = vrot.lane.b32.xlu0 %v357, 16
      %v964 = vpop.permute.xlu0 %963
      %965 = vrot.lane.b32.xlu0 %v358, 16
      %v966 = vpop.permute.xlu0 %965
      %967 = vrot.lane.b32.xlu0 %v359, 16
      %v968 = vpop.permute.xlu0 %967
      %969 = vrot.lane.b32.xlu0 %v360, 16
      %v970 = vpop.permute.xlu0 %969
      %971 = vrot.lane.b32.xlu0 %v361, 16
      %v972 = vpop.permute.xlu0 %971
      %1037 = vrot.lane.b32.xlu0 %v362, 20
      %v1038 = vpop.permute.xlu0 %1037
      %1039 = vrot.lane.b32.xlu0 %v363, 20
      %v1040 = vpop.permute.xlu0 %1039
      %1041 = vrot.lane.b32.xlu0 %v364, 20
      %v1042 = vpop.permute.xlu0 %1041
      %1043 = vrot.lane.b32.xlu0 %v365, 20
      %v1044 = vpop.permute.xlu0 %1043
      %1045 = vrot.lane.b32.xlu0 %v366, 20
      %v1046 = vpop.permute.xlu0 %1045
      %1047 = vrot.lane.b32.xlu0 %v367, 20
      %v1048 = vpop.permute.xlu0 %1047
      %1049 = vrot.lane.b32.xlu0 %v368, 20
      %v1050 = vpop.permute.xlu0 %1049
      %1051 = vrot.lane.b32.xlu0 %v369, 20
      %v1052 = vpop.permute.xlu0 %1051
      %1053 = vrot.lane.b32.xlu0 %v370, 20
      %v1054 = vpop.permute.xlu0 %1053
      %1055 = vrot.lane.b32.xlu0 %v371, 20
      %v1056 = vpop.permute.xlu0 %1055
      %1057 = vrot.lane.b32.xlu0 %v372, 20
      %v1058 = vpop.permute.xlu0 %1057
      %1059 = vrot.lane.b32.xlu0 %v373, 20
      %v1060 = vpop.permute.xlu0 %1059
      %1061 = vrot.lane.b32.xlu0 %v374, 20
      %v1062 = vpop.permute.xlu0 %1061
      %1063 = vrot.lane.b32.xlu0 %v375, 20
      %v1064 = vpop.permute.xlu0 %1063
      %1065 = vrot.lane.b32.xlu0 %v376, 20
      %v1066 = vpop.permute.xlu0 %1065
      %1067 = vrot.lane.b32.xlu0 %v377, 20
      %v1068 = vpop.permute.xlu0 %1067
      %1069 = vrot.lane.b32.xlu0 %v378, 20
      %v1070 = vpop.permute.xlu0 %1069
      %1071 = vrot.lane.b32.xlu0 %v379, 20
      %v1072 = vpop.permute.xlu0 %1071
      %1073 = vrot.lane.b32.xlu0 %v380, 20
      %v1074 = vpop.permute.xlu0 %1073
      %1075 = vrot.lane.b32.xlu0 %v381, 20
      %v1076 = vpop.permute.xlu0 %1075
      %1077 = vrot.lane.b32.xlu0 %v382, 20
      %v1078 = vpop.permute.xlu0 %1077
      %1079 = vrot.lane.b32.xlu0 %v383, 20
      %v1080 = vpop.permute.xlu0 %1079
      %1081 = vrot.lane.b32.xlu0 %v384, 20
      %v1082 = vpop.permute.xlu0 %1081
      %1083 = vrot.lane.b32.xlu0 %v385, 20
      %v1084 = vpop.permute.xlu0 %1083
      %1085 = vrot.lane.b32.xlu0 %v386, 20
      %v1086 = vpop.permute.xlu0 %1085
      %1087 = vrot.lane.b32.xlu0 %v387, 20
      %v1088 = vpop.permute.xlu0 %1087
      %1089 = vrot.lane.b32.xlu0 %v388, 20
      %v1090 = vpop.permute.xlu0 %1089
      %1091 = vrot.lane.b32.xlu0 %v389, 20
      %v1092 = vpop.permute.xlu0 %1091
      %1093 = vrot.lane.b32.xlu0 %v390, 20
      %v1094 = vpop.permute.xlu0 %1093
      %1095 = vrot.lane.b32.xlu0 %v391, 20
      %v1096 = vpop.permute.xlu0 %1095
      %1097 = vrot.lane.b32.xlu0 %v392, 20
      %v1098 = vpop.permute.xlu0 %1097
      %1099 = vrot.lane.b32.xlu0 %v393, 20
      %v1100 = vpop.permute.xlu0 %1099
      %1165 = vrot.lane.b32.xlu0 %v397, 24
      %v1166 = vpop.permute.xlu0 %1165
      %1167 = vrot.lane.b32.xlu0 %v398, 24
      %v1168 = vpop.permute.xlu0 %1167
      %1169 = vrot.lane.b32.xlu0 %v399, 24
      %v1170 = vpop.permute.xlu0 %1169
      %1171 = vrot.lane.b32.xlu0 %v400, 24
      %v1172 = vpop.permute.xlu0 %1171
      %1173 = vrot.lane.b32.xlu0 %v401, 24
      %v1174 = vpop.permute.xlu0 %1173
      %1175 = vrot.lane.b32.xlu0 %v402, 24
      %v1176 = vpop.permute.xlu0 %1175
      %1177 = vrot.lane.b32.xlu0 %v403, 24
      %v1178 = vpop.permute.xlu0 %1177
      %1179 = vrot.lane.b32.xlu0 %v404, 24
      %v1180 = vpop.permute.xlu0 %1179
      %1181 = vrot.lane.b32.xlu0 %v405, 24
      %v1182 = vpop.permute.xlu0 %1181
      %1183 = vrot.lane.b32.xlu0 %v406, 24
      %v1184 = vpop.permute.xlu0 %1183
      %1185 = vrot.lane.b32.xlu0 %v407, 24
      %v1186 = vpop.permute.xlu0 %1185
      %1187 = vrot.lane.b32.xlu0 %v408, 24
      %v1188 = vpop.permute.xlu0 %1187
      %1189 = vrot.lane.b32.xlu0 %v409, 24
      %v1190 = vpop.permute.xlu0 %1189
      %1191 = vrot.lane.b32.xlu0 %v410, 24
      %v1192 = vpop.permute.xlu0 %1191
      %1193 = vrot.lane.b32.xlu0 %v411, 24
      %v1194 = vpop.permute.xlu0 %1193
      %1195 = vrot.lane.b32.xlu0 %v412, 24
      %v1196 = vpop.permute.xlu0 %1195
      %1197 = vrot.lane.b32.xlu0 %v413, 24
      %v1198 = vpop.permute.xlu0 %1197
      %1199 = vrot.lane.b32.xlu0 %v414, 24
      %v1200 = vpop.permute.xlu0 %1199
      %1201 = vrot.lane.b32.xlu0 %v415, 24
      %v1202 = vpop.permute.xlu0 %1201
      %1203 = vrot.lane.b32.xlu0 %v416, 24
      %v1204 = vpop.permute.xlu0 %1203
      %1205 = vrot.lane.b32.xlu0 %v417, 24
      %v1206 = vpop.permute.xlu0 %1205
      %1207 = vrot.lane.b32.xlu0 %v418, 24
      %v1208 = vpop.permute.xlu0 %1207
      %1209 = vrot.lane.b32.xlu0 %v419, 24
      %v1210 = vpop.permute.xlu0 %1209
      %1211 = vrot.lane.b32.xlu0 %v420, 24
      %v1212 = vpop.permute.xlu0 %1211
      %1213 = vrot.lane.b32.xlu0 %v421, 24
      %v1214 = vpop.permute.xlu0 %1213
      %1215 = vrot.lane.b32.xlu0 %v422, 24
      %v1216 = vpop.permute.xlu0 %1215
      %1217 = vrot.lane.b32.xlu0 %v423, 24
      %v1218 = vpop.permute.xlu0 %1217
      %1219 = vrot.lane.b32.xlu0 %v424, 24
      %v1220 = vpop.permute.xlu0 %1219
      %1221 = vrot.lane.b32.xlu0 %v425, 24
      %v1222 = vpop.permute.xlu0 %1221
      %1223 = vrot.lane.b32.xlu0 %v426, 24
      %v1224 = vpop.permute.xlu0 %1223
      %1225 = vrot.lane.b32.xlu0 %v427, 24
      %v1226 = vpop.permute.xlu0 %1225
      %1227 = vrot.lane.b32.xlu0 %v428, 24
      %v1228 = vpop.permute.xlu0 %1227
      %1293 = vrot.lane.b32.xlu0 %v429, 28
      %v1294 = vpop.permute.xlu0 %1293
      %1295 = vrot.lane.b32.xlu0 %v430, 28
      %v1296 = vpop.permute.xlu0 %1295
      %1297 = vrot.lane.b32.xlu0 %v431, 28
      %v1298 = vpop.permute.xlu0 %1297
      %1299 = vrot.lane.b32.xlu0 %v432, 28
      %v1300 = vpop.permute.xlu0 %1299
      %1301 = vrot.lane.b32.xlu0 %v433, 28
      %v1302 = vpop.permute.xlu0 %1301
      %1303 = vrot.lane.b32.xlu0 %v434, 28
      %v1304 = vpop.permute.xlu0 %1303
      %1305 = vrot.lane.b32.xlu0 %v435, 28
      %v1306 = vpop.permute.xlu0 %1305
      %1307 = vrot.lane.b32.xlu0 %v436, 28
      %v1308 = vpop.permute.xlu0 %1307
      %1309 = vrot.lane.b32.xlu0 %v437, 28
      %v1310 = vpop.permute.xlu0 %1309
      %1311 = vrot.lane.b32.xlu0 %v438, 28
      %v1312 = vpop.permute.xlu0 %1311
      %1313 = vrot.lane.b32.xlu0 %v439, 28
      %v1314 = vpop.permute.xlu0 %1313
      %1315 = vrot.lane.b32.xlu0 %v440, 28
      %v1316 = vpop.permute.xlu0 %1315
      %1317 = vrot.lane.b32.xlu0 %v441, 28
      %v1318 = vpop.permute.xlu0 %1317
      %1319 = vrot.lane.b32.xlu0 %v442, 28
      %v1320 = vpop.permute.xlu0 %1319
      %1321 = vrot.lane.b32.xlu0 %v443, 28
      %v1322 = vpop.permute.xlu0 %1321
      %1323 = vrot.lane.b32.xlu0 %v444, 28
      %v1324 = vpop.permute.xlu0 %1323
      %1325 = vrot.lane.b32.xlu0 %v445, 28
      %v1326 = vpop.permute.xlu0 %1325
      %1327 = vrot.lane.b32.xlu0 %v446, 28
      %v1328 = vpop.permute.xlu0 %1327
      %1329 = vrot.lane.b32.xlu0 %v447, 28
      %v1330 = vpop.permute.xlu0 %1329
      %1331 = vrot.lane.b32.xlu0 %v448, 28
      %v1332 = vpop.permute.xlu0 %1331
      %1333 = vrot.lane.b32.xlu0 %v449, 28
      %v1334 = vpop.permute.xlu0 %1333
      %1335 = vrot.lane.b32.xlu0 %v450, 28
      %v1336 = vpop.permute.xlu0 %1335
      %1337 = vrot.lane.b32.xlu0 %v451, 28
      %v1338 = vpop.permute.xlu0 %1337
      %1339 = vrot.lane.b32.xlu0 %v452, 28
      %v1340 = vpop.permute.xlu0 %1339
      %1341 = vrot.lane.b32.xlu0 %v453, 28
      %v1342 = vpop.permute.xlu0 %1341
      %1343 = vrot.lane.b32.xlu0 %v454, 28
      %v1344 = vpop.permute.xlu0 %1343
      %1345 = vrot.lane.b32.xlu0 %v455, 28
      %v1346 = vpop.permute.xlu0 %1345
      %1347 = vrot.lane.b32.xlu0 %v456, 28
      %v1348 = vpop.permute.xlu0 %1347
      %1349 = vrot.lane.b32.xlu0 %v457, 28
      %v1350 = vpop.permute.xlu0 %1349
      %1351 = vrot.lane.b32.xlu0 %v458, 28
      %v1352 = vpop.permute.xlu0 %1351
      %1353 = vrot.lane.b32.xlu0 %v459, 28
      %v1354 = vpop.permute.xlu0 %1353
      %1355 = vrot.lane.b32.xlu0 %v460, 28
      %v1356 = vpop.permute.xlu0 %1355
      %1421 = vrot.lane.b32.xlu0 %v461, 32
      %v1422 = vpop.permute.xlu0 %1421
      %1423 = vrot.lane.b32.xlu0 %v462, 32
      %v1424 = vpop.permute.xlu0 %1423
      %1425 = vrot.lane.b32.xlu0 %v463, 32
      %v1426 = vpop.permute.xlu0 %1425
      %1427 = vrot.lane.b32.xlu0 %v464, 32
      %v1428 = vpop.permute.xlu0 %1427
      %1429 = vrot.lane.b32.xlu0 %v465, 32
      %v1430 = vpop.permute.xlu0 %1429
      %1431 = vrot.lane.b32.xlu0 %v466, 32
      %v1432 = vpop.permute.xlu0 %1431
      %1433 = vrot.lane.b32.xlu0 %v467, 32
      %v1434 = vpop.permute.xlu0 %1433
      %1435 = vrot.lane.b32.xlu0 %v468, 32
      %v1436 = vpop.permute.xlu0 %1435
      %1437 = vrot.lane.b32.xlu0 %v469, 32
      %v1438 = vpop.permute.xlu0 %1437
      %1439 = vrot.lane.b32.xlu0 %v470, 32
      %v1440 = vpop.permute.xlu0 %1439
      %1441 = vrot.lane.b32.xlu0 %v471, 32
      %v1442 = vpop.permute.xlu0 %1441
      %1443 = vrot.lane.b32.xlu0 %v472, 32
      %v1444 = vpop.permute.xlu0 %1443
      %1445 = vrot.lane.b32.xlu0 %v473, 32
      %v1446 = vpop.permute.xlu0 %1445
      %1447 = vrot.lane.b32.xlu0 %v474, 32
      %v1448 = vpop.permute.xlu0 %1447
      %1449 = vrot.lane.b32.xlu0 %v475, 32
      %v1450 = vpop.permute.xlu0 %1449
      %1451 = vrot.lane.b32.xlu0 %v476, 32
      %v1452 = vpop.permute.xlu0 %1451
      %1453 = vrot.lane.b32.xlu0 %v477, 32
      %v1454 = vpop.permute.xlu0 %1453
      %1455 = vrot.lane.b32.xlu0 %v478, 32
      %v1456 = vpop.permute.xlu0 %1455
      %1457 = vrot.lane.b32.xlu0 %v479, 32
      %v1458 = vpop.permute.xlu0 %1457
      %1459 = vrot.lane.b32.xlu0 %v480, 32
      %v1460 = vpop.permute.xlu0 %1459
      %1461 = vrot.lane.b32.xlu0 %v481, 32
      %v1462 = vpop.permute.xlu0 %1461
      %1463 = vrot.lane.b32.xlu0 %v482, 32
      %v1464 = vpop.permute.xlu0 %1463
      %1465 = vrot.lane.b32.xlu0 %v483, 32
      %v1466 = vpop.permute.xlu0 %1465
      %1467 = vrot.lane.b32.xlu0 %v484, 32
      %v1468 = vpop.permute.xlu0 %1467
      %1469 = vrot.lane.b32.xlu0 %v485, 32
      %v1470 = vpop.permute.xlu0 %1469
      %1471 = vrot.lane.b32.xlu0 %v486, 32
      %v1472 = vpop.permute.xlu0 %1471
      %1473 = vrot.lane.b32.xlu0 %v487, 32
      %v1474 = vpop.permute.xlu0 %1473
      %1475 = vrot.lane.b32.xlu0 %v488, 32
      %v1476 = vpop.permute.xlu0 %1475
      %1477 = vrot.lane.b32.xlu0 %v489, 32
      %v1478 = vpop.permute.xlu0 %1477
      %1479 = vrot.lane.b32.xlu0 %v490, 32
      %v1480 = vpop.permute.xlu0 %1479
      %1481 = vrot.lane.b32.xlu0 %v491, 32
      %v1482 = vpop.permute.xlu0 %1481
      %1483 = vrot.lane.b32.xlu0 %v492, 32
      %v1484 = vpop.permute.xlu0 %1483
      %vm1517 = vcmask 31744
      %v1518 = vsel %vm1517, %v199, %v526
      %v1519 = vsel %vm1517, %v200, %v528
      %v1520 = vsel %vm1517, %v201, %v530
      %v1521 = vsel %vm1517, %v202, %v532
      %v1522 = vsel %vm1517, %v203, %v534
      %v1523 = vsel %vm1517, %v204, %v536
      %v1524 = vsel %vm1517, %v205, %v538
      %v1525 = vsel %vm1517, %v206, %v540
      %v1526 = vsel %vm1517, %v207, %v542
      %v1527 = vsel %vm1517, %v208, %v544
      %v1528 = vsel %vm1517, %v209, %v546
      %v1529 = vsel %vm1517, %v210, %v548
      %v1530 = vsel %vm1517, %v211, %v550
      %v1531 = vsel %vm1517, %v212, %v552
      %v1532 = vsel %vm1517, %v213, %v554
      %v1533 = vsel %vm1517, %v214, %v556
      %v1534 = vsel %vm1517, %v215, %v558
      %v1535 = vsel %vm1517, %v216, %v560
      %v1536 = vsel %vm1517, %v217, %v562
      %v1537 = vsel %vm1517, %v218, %v564
      %v1538 = vsel %vm1517, %v219, %v566
      %v1539 = vsel %vm1517, %v220, %v568
      %v1540 = vsel %vm1517, %v221, %v570
      %v1541 = vsel %vm1517, %v222, %v572
      %v1542 = vsel %vm1517, %v223, %v574
      %v1543 = vsel %vm1517, %v224, %v576
      %v1544 = vsel %vm1517, %v225, %v578
      %v1545 = vsel %vm1517, %v226, %v580
      %v1546 = vsel %vm1517, %v227, %v582
      %v1547 = vsel %vm1517, %v228, %v584
      %v1548 = vsel %vm1517, %v229, %v586
      %v1549 = vsel %vm1517, %v230, %v588
      %vm1550 = vcmask 64512
      %v1551 = vsel %vm1550, %v1518, %v654
      %v1552 = vsel %vm1550, %v1519, %v656
      %v1553 = vsel %vm1550, %v1520, %v658
      %v1554 = vsel %vm1550, %v1521, %v660
      %v1555 = vsel %vm1550, %v1522, %v662
      %v1556 = vsel %vm1550, %v1523, %v664
      %v1557 = vsel %vm1550, %v1524, %v666
      %v1558 = vsel %vm1550, %v1525, %v668
      %v1559 = vsel %vm1550, %v1526, %v670
      %v1560 = vsel %vm1550, %v1527, %v672
      %v1561 = vsel %vm1550, %v1528, %v674
      %v1562 = vsel %vm1550, %v1529, %v676
      %v1563 = vsel %vm1550, %v1530, %v678
      %v1564 = vsel %vm1550, %v1531, %v680
      %v1565 = vsel %vm1550, %v1532, %v682
      %v1566 = vsel %vm1550, %v1533, %v684
      %v1567 = vsel %vm1550, %v1534, %v686
      %v1568 = vsel %vm1550, %v1535, %v688
      %v1569 = vsel %vm1550, %v1536, %v690
      %v1570 = vsel %vm1550, %v1537, %v692
      %v1571 = vsel %vm1550, %v1538, %v694
      %v1572 = vsel %vm1550, %v1539, %v696
      %v1573 = vsel %vm1550, %v1540, %v698
      %v1574 = vsel %vm1550, %v1541, %v700
      %v1575 = vsel %vm1550, %v1542, %v702
      %v1576 = vsel %vm1550, %v1543, %v704
      %v1577 = vsel %vm1550, %v1544, %v706
      %v1578 = vsel %vm1550, %v1545, %v708
      %v1579 = vsel %vm1550, %v1546, %v710
      %v1580 = vsel %vm1550, %v1547, %v712
      %v1581 = vsel %vm1550, %v1548, %v714
      %v1582 = vsel %vm1550, %v1549, %v716
      %vm1583 = vcmask 97280
      %v1584 = vsel %vm1583, %v1551, %v782
      %v1585 = vsel %vm1583, %v1552, %v784
      %v1586 = vsel %vm1583, %v1553, %v786
      %v1587 = vsel %vm1583, %v1554, %v788
      %v1588 = vsel %vm1583, %v1555, %v790
      %v1589 = vsel %vm1583, %v1556, %v792
      %v1590 = vsel %vm1583, %v1557, %v794
      %v1591 = vsel %vm1583, %v1558, %v796
      %v1592 = vsel %vm1583, %v1559, %v798
      %v1593 = vsel %vm1583, %v1560, %v800
      %v1594 = vsel %vm1583, %v1561, %v802
      %v1595 = vsel %vm1583, %v1562, %v804
      %v1596 = vsel %vm1583, %v1563, %v806
      %v1597 = vsel %vm1583, %v1564, %v808
      %v1598 = vsel %vm1583, %v1565, %v810
      %v1599 = vsel %vm1583, %v1566, %v812
      %v1600 = vsel %vm1583, %v1567, %v814
      %v1601 = vsel %vm1583, %v1568, %v816
      %v1602 = vsel %vm1583, %v1569, %v818
      %v1603 = vsel %vm1583, %v1570, %v820
      %v1604 = vsel %vm1583, %v1571, %v822
      %v1605 = vsel %vm1583, %v1572, %v824
      %v1606 = vsel %vm1583, %v1573, %v826
      %v1607 = vsel %vm1583, %v1574, %v828
      %v1608 = vsel %vm1583, %v1575, %v830
      %v1609 = vsel %vm1583, %v1576, %v832
      %v1610 = vsel %vm1583, %v1577, %v834
      %v1611 = vsel %vm1583, %v1578, %v836
      %v1612 = vsel %vm1583, %v1579, %v838
      %v1613 = vsel %vm1583, %v1580, %v840
      %v1614 = vsel %vm1583, %v1581, %v842
      %v1615 = vsel %vm1583, %v1582, %v844
      %vm1616 = vcmask 130048
      %v1617 = vsel %vm1616, %v1584, %v910
      %v1618 = vsel %vm1616, %v1585, %v912
      %v1619 = vsel %vm1616, %v1586, %v914
      %v1620 = vsel %vm1616, %v1587, %v916
      %v1621 = vsel %vm1616, %v1588, %v918
      %v1622 = vsel %vm1616, %v1589, %v920
      %v1623 = vsel %vm1616, %v1590, %v922
      %v1624 = vsel %vm1616, %v1591, %v924
      %v1625 = vsel %vm1616, %v1592, %v926
      %v1626 = vsel %vm1616, %v1593, %v928
      %v1627 = vsel %vm1616, %v1594, %v930
      %v1628 = vsel %vm1616, %v1595, %v932
      %v1629 = vsel %vm1616, %v1596, %v934
      %v1630 = vsel %vm1616, %v1597, %v936
      %v1631 = vsel %vm1616, %v1598, %v938
      %v1632 = vsel %vm1616, %v1599, %v940
      %v1633 = vsel %vm1616, %v1600, %v942
      %v1634 = vsel %vm1616, %v1601, %v944
      %v1635 = vsel %vm1616, %v1602, %v946
      %v1636 = vsel %vm1616, %v1603, %v948
      %v1637 = vsel %vm1616, %v1604, %v950
      %v1638 = vsel %vm1616, %v1605, %v952
      %v1639 = vsel %vm1616, %v1606, %v954
      %v1640 = vsel %vm1616, %v1607, %v956
      %v1641 = vsel %vm1616, %v1608, %v958
      %v1642 = vsel %vm1616, %v1609, %v960
      %v1643 = vsel %vm1616, %v1610, %v962
      %v1644 = vsel %vm1616, %v1611, %v964
      %v1645 = vsel %vm1616, %v1612, %v966
      %v1646 = vsel %vm1616, %v1613, %v968
      %v1647 = vsel %vm1616, %v1614, %v970
      %v1648 = vsel %vm1616, %v1615, %v972
      %vm1649 = vcmask 162816
      %v1650 = vsel %vm1649, %v1617, %v1038
      %v1651 = vsel %vm1649, %v1618, %v1040
      %v1652 = vsel %vm1649, %v1619, %v1042
      %v1653 = vsel %vm1649, %v1620, %v1044
      %v1654 = vsel %vm1649, %v1621, %v1046
      %v1655 = vsel %vm1649, %v1622, %v1048
      %v1656 = vsel %vm1649, %v1623, %v1050
      %v1657 = vsel %vm1649, %v1624, %v1052
      %v1658 = vsel %vm1649, %v1625, %v1054
      %v1659 = vsel %vm1649, %v1626, %v1056
      %v1660 = vsel %vm1649, %v1627, %v1058
      %v1661 = vsel %vm1649, %v1628, %v1060
      %v1662 = vsel %vm1649, %v1629, %v1062
      %v1663 = vsel %vm1649, %v1630, %v1064
      %v1664 = vsel %vm1649, %v1631, %v1066
      %v1665 = vsel %vm1649, %v1632, %v1068
      %v1666 = vsel %vm1649, %v1633, %v1070
      %v1667 = vsel %vm1649, %v1634, %v1072
      %v1668 = vsel %vm1649, %v1635, %v1074
      %v1669 = vsel %vm1649, %v1636, %v1076
      %v1670 = vsel %vm1649, %v1637, %v1078
      %v1671 = vsel %vm1649, %v1638, %v1080
      %v1672 = vsel %vm1649, %v1639, %v1082
      %v1673 = vsel %vm1649, %v1640, %v1084
      %v1674 = vsel %vm1649, %v1641, %v1086
      %v1675 = vsel %vm1649, %v1642, %v1088
      %v1676 = vsel %vm1649, %v1643, %v1090
      %v1677 = vsel %vm1649, %v1644, %v1092
      %v1678 = vsel %vm1649, %v1645, %v1094
      %v1679 = vsel %vm1649, %v1646, %v1096
      %v1680 = vsel %vm1649, %v1647, %v1098
      %v1681 = vsel %vm1649, %v1648, %v1100
      %vm1682 = vcmask 195584
      %v1683 = vsel %vm1682, %v1650, %v1166
      %v1684 = vsel %vm1682, %v1651, %v1168
      %v1685 = vsel %vm1682, %v1652, %v1170
      %v1686 = vsel %vm1682, %v1653, %v1172
      %v1687 = vsel %vm1682, %v1654, %v1174
      %v1688 = vsel %vm1682, %v1655, %v1176
      %v1689 = vsel %vm1682, %v1656, %v1178
      %v1690 = vsel %vm1682, %v1657, %v1180
      %v1691 = vsel %vm1682, %v1658, %v1182
      %v1692 = vsel %vm1682, %v1659, %v1184
      %v1693 = vsel %vm1682, %v1660, %v1186
      %v1694 = vsel %vm1682, %v1661, %v1188
      %v1695 = vsel %vm1682, %v1662, %v1190
      %v1696 = vsel %vm1682, %v1663, %v1192
      %v1697 = vsel %vm1682, %v1664, %v1194
      %v1698 = vsel %vm1682, %v1665, %v1196
      %v1699 = vsel %vm1682, %v1666, %v1198
      %v1700 = vsel %vm1682, %v1667, %v1200
      %v1701 = vsel %vm1682, %v1668, %v1202
      %v1702 = vsel %vm1682, %v1669, %v1204
      %v1703 = vsel %vm1682, %v1670, %v1206
      %v1704 = vsel %vm1682, %v1671, %v1208
      %v1705 = vsel %vm1682, %v1672, %v1210
      %v1706 = vsel %vm1682, %v1673, %v1212
      %v1707 = vsel %vm1682, %v1674, %v1214
      %v1708 = vsel %vm1682, %v1675, %v1216
      %v1709 = vsel %vm1682, %v1676, %v1218
      %v1710 = vsel %vm1682, %v1677, %v1220
      %v1711 = vsel %vm1682, %v1678, %v1222
      %v1712 = vsel %vm1682, %v1679, %v1224
      %v1713 = vsel %vm1682, %v1680, %v1226
      %v1714 = vsel %vm1682, %v1681, %v1228
      %vm1715 = vcmask 228352
      %v1716 = vsel %vm1715, %v1683, %v1294
      %v1717 = vsel %vm1715, %v1684, %v1296
      %v1718 = vsel %vm1715, %v1685, %v1298
      %v1719 = vsel %vm1715, %v1686, %v1300
      %v1720 = vsel %vm1715, %v1687, %v1302
      %v1721 = vsel %vm1715, %v1688, %v1304
      %v1722 = vsel %vm1715, %v1689, %v1306
      %v1723 = vsel %vm1715, %v1690, %v1308
      %v1724 = vsel %vm1715, %v1691, %v1310
      %v1725 = vsel %vm1715, %v1692, %v1312
      %v1726 = vsel %vm1715, %v1693, %v1314
      %v1727 = vsel %vm1715, %v1694, %v1316
      %v1728 = vsel %vm1715, %v1695, %v1318
      %v1729 = vsel %vm1715, %v1696, %v1320
      %v1730 = vsel %vm1715, %v1697, %v1322
      %v1731 = vsel %vm1715, %v1698, %v1324
      %v1732 = vsel %vm1715, %v1699, %v1326
      %v1733 = vsel %vm1715, %v1700, %v1328
      %v1734 = vsel %vm1715, %v1701, %v1330
      %v1735 = vsel %vm1715, %v1702, %v1332
      %v1736 = vsel %vm1715, %v1703, %v1334
      %v1737 = vsel %vm1715, %v1704, %v1336
      %v1738 = vsel %vm1715, %v1705, %v1338
      %v1739 = vsel %vm1715, %v1706, %v1340
      %v1740 = vsel %vm1715, %v1707, %v1342
      %v1741 = vsel %vm1715, %v1708, %v1344
      %v1742 = vsel %vm1715, %v1709, %v1346
      %v1743 = vsel %vm1715, %v1710, %v1348
      %v1744 = vsel %vm1715, %v1711, %v1350
      %v1745 = vsel %vm1715, %v1712, %v1352
      %v1746 = vsel %vm1715, %v1713, %v1354
      %v1747 = vsel %vm1715, %v1714, %v1356
      %vm1748 = vcmask 261120
      %v1749 = vsel %vm1748, %v1716, %v1422
      %v1750 = vsel %vm1748, %v1717, %v1424
      %v1751 = vsel %vm1748, %v1718, %v1426
      %v1752 = vsel %vm1748, %v1719, %v1428
      %v1753 = vsel %vm1748, %v1720, %v1430
      %v1754 = vsel %vm1748, %v1721, %v1432
      %v1755 = vsel %vm1748, %v1722, %v1434
      %v1756 = vsel %vm1748, %v1723, %v1436
      %v1757 = vsel %vm1748, %v1724, %v1438
      %v1758 = vsel %vm1748, %v1725, %v1440
      %v1759 = vsel %vm1748, %v1726, %v1442
      %v1760 = vsel %vm1748, %v1727, %v1444
      %v1761 = vsel %vm1748, %v1728, %v1446
      %v1762 = vsel %vm1748, %v1729, %v1448
      %v1763 = vsel %vm1748, %v1730, %v1450
      %v1764 = vsel %vm1748, %v1731, %v1452
      %v1765 = vsel %vm1748, %v1732, %v1454
      %v1766 = vsel %vm1748, %v1733, %v1456
      %v1767 = vsel %vm1748, %v1734, %v1458
      %v1768 = vsel %vm1748, %v1735, %v1460
      %v1769 = vsel %vm1748, %v1736, %v1462
      %v1770 = vsel %vm1748, %v1737, %v1464
      %v1771 = vsel %vm1748, %v1738, %v1466
      %v1772 = vsel %vm1748, %v1739, %v1468
      %v1773 = vsel %vm1748, %v1740, %v1470
      %v1774 = vsel %vm1748, %v1741, %v1472
      %v1775 = vsel %vm1748, %v1742, %v1474
      %v1776 = vsel %vm1748, %v1743, %v1476
      %v1777 = vsel %vm1748, %v1744, %v1478
      %v1778 = vsel %vm1748, %v1745, %v1480
      %v1779 = vsel %vm1748, %v1746, %v1482
      %v1780 = vsel %vm1748, %v1747, %v1484
      %v1781 = vld [vmem:[%s1] sm:$0xff]
      %v1782 = vld [vmem:[%s1 + $0x8] sm:$0xff]
      %v1783 = vld [vmem:[%s1 + $0x10] sm:$0xff]
      %v1784 = vld [vmem:[%s1 + $0x18] sm:$0xff]
      %v1785 = vld [vmem:[%s1 + $0x20] sm:$0xf]
      %v1786 = vld [vmem:[%s2] sm:$0x1]
      %v1788 = vlaneseq
      %v1789 = vshrl.u32 %v1788, 7
      %v1790 = vsub.s32 0, %v1789
      %v1791 = vrot.slane %v1786, %v1790
      %vm1793 = vcmask 293888
      %v1795 = vsel %vm1793, %v1749, 0
      %v1798 = vsel %vm1793, %v1750, 0
      %v1801 = vsel %vm1793, %v1751, 0
      %v1804 = vsel %vm1793, %v1752, 0
      %v1807 = vsel %vm1793, %v1753, 0
      %v1810 = vsel %vm1793, %v1754, 0
      %v1813 = vsel %vm1793, %v1755, 0
      %v1816 = vsel %vm1793, %v1756, 0
      %v1819 = vsel %vm1793, %v1757, 0
      %v1822 = vsel %vm1793, %v1758, 0
      %v1825 = vsel %vm1793, %v1759, 0
      %v1828 = vsel %vm1793, %v1760, 0
      %v1831 = vsel %vm1793, %v1761, 0
      %v1834 = vsel %vm1793, %v1762, 0
      %v1837 = vsel %vm1793, %v1763, 0
      %v1840 = vsel %vm1793, %v1764, 0
      %v1843 = vsel %vm1793, %v1765, 0
      %v1846 = vsel %vm1793, %v1766, 0
      %v1849 = vsel %vm1793, %v1767, 0
      %v1852 = vsel %vm1793, %v1768, 0
      %v1855 = vsel %vm1793, %v1769, 0
      %v1858 = vsel %vm1793, %v1770, 0
      %v1861 = vsel %vm1793, %v1771, 0
      %v1864 = vsel %vm1793, %v1772, 0
      %v1867 = vsel %vm1793, %v1773, 0
      %v1870 = vsel %vm1793, %v1774, 0
      %v1873 = vsel %vm1793, %v1775, 0
      %v1876 = vsel %vm1793, %v1776, 0
      %v1879 = vsel %vm1793, %v1777, 0
      %v1882 = vsel %vm1793, %v1778, 0
      %v1885 = vsel %vm1793, %v1779, 0
      %v1888 = vsel %vm1793, %v1780, 0
      %vm1890 = vcmask 1043456
      %v1892 = vsel %vm1890, %v1785, 0
      %1894 = vmatprep.subr.mxu0 0.0
      %1895 = vmatpush1.msra.mxu0 0.0
      %1896 = vmatprep.subr.mxu0 0.0
      %1897 = vmatpush1.msra.mxu0 0.0
      %1898 = vmatprep.subr.mxu0 0.0
      %1899 = vmatpush1.msra.mxu0 0.0
      %1900 = vmatprep.subr.mxu0 0.0
      %1901 = vmatpush1.msra.mxu0 0.0
      %1902 = vmatprep.subr.mxu0 0.0
      %1903 = vmatpush1.msra.mxu0 0.0
      %1904 = vmatprep.subr.mxu0 0.0
      %1905 = vmatpush1.msra.mxu0 0.0
      %1906 = vmatprep.subr.mxu0 0.0
      %1907 = vmatpush1.msra.mxu0 0.0
      %1908 = vmatprep.subr.mxu0 0.0
      %1909 = vmatpush1.msra.mxu0 0.0
      %1910 = vmatprep.subr.mxu0 0.0
      %1911 = vmatpush1.msra.mxu0 0.0
      %1912 = vmatprep.subr.mxu0 0.0
      %1913 = vmatpush1.msra.mxu0 0.0
      %1914 = vmatprep.subr.mxu0 0.0
      %1915 = vmatpush1.msra.mxu0 0.0
      %1916 = vmatprep.subr.mxu0 0.0
      %1917 = vmatpush1.msra.mxu0 %v1892
      %1918 = vmatprep.subr.mxu0 0.0
      %1919 = vmatpush1.msra.mxu0 %v1784
      %1920 = vmatprep.subr.mxu0 0.0
      %1921 = vmatpush1.msra.mxu0 %v1783
      %1922 = vmatprep.subr.mxu0 0.0
      %1923 = vmatpush1.msra.mxu0 %v1782
      %1924 = vmatprep.subr.mxu0 0.0
      %1925 = vmatpush1.msra.mxu0 %v1781
      %1926 = vmatprep.subr.mxu0 0.0
      %1927 = vmatpush2.msra.mxu0 0.0
      %1928 = vmatprep.subr.mxu0 0.0
      %1929 = vmatpush2.msra.mxu0 0.0
      %1930 = vmatprep.subr.mxu0 0.0
      %1931 = vmatpush2.msra.mxu0 0.0
      %1932 = vmatprep.subr.mxu0 0.0
      %1933 = vmatpush2.msra.mxu0 0.0
      %1934 = vmatprep.subr.mxu0 0.0
      %1935 = vmatpush2.msra.mxu0 0.0
      %1936 = vmatprep.subr.mxu0 0.0
      %1937 = vmatpush2.msra.mxu0 0.0
      %1938 = vmatprep.subr.mxu0 0.0
      %1939 = vmatpush2.msra.mxu0 0.0
      %1940 = vmatprep.subr.mxu0 0.0
      %1941 = vmatpush2.msra.mxu0 0.0
      %1942 = vmatprep.subr.mxu0 0.0
      %1943 = vmatpush2.msra.mxu0 0.0
      %1944 = vmatprep.subr.mxu0 0.0
      %1945 = vmatpush2.msra.mxu0 0.0
      %1946 = vmatprep.subr.mxu0 0.0
      %1947 = vmatpush2.msra.mxu0 0.0
      %1948 = vmatprep.subr.mxu0 0.0
      %1949 = vmatpush2.msra.mxu0 0.0
      %1950 = vmatprep.subr.mxu0 0.0
      %1951 = vmatpush2.msra.mxu0 0.0
      %1952 = vmatprep.subr.mxu0 0.0
      %1953 = vmatpush2.msra.mxu0 0.0
      %1954 = vmatprep.subr.mxu0 0.0
      %1955 = vmatpush2.msra.mxu0 0.0
      %1956 = vmatprep.subr.mxu0 0.0
      %1957 = vmatpush2.msra.mxu0 0.0
      %1958 = vmatprep.mubr.f32.mxu0 0.0
      %1959 = vmatmul.mubr.f32.gmra.mxu0 %v1795
      %v1960 = vpop.f32.mrf.mxu0
      %v1961 = vadd.f32 %v1791, %v1960
      %v1962 = vpop.f32.mrf.mxu0
      %1963 = vmatprep.mubr.f32.mxu0 0.0
      %1964 = vmatmul.mubr.f32.gmra.mxu0 %v1798
      %v1965 = vpop.f32.mrf.mxu0
      %v1966 = vadd.f32 %v1791, %v1965
      %v1967 = vpop.f32.mrf.mxu0
      %1968 = vmatprep.mubr.f32.mxu0 0.0
      %1969 = vmatmul.mubr.f32.gmra.mxu0 %v1801
      %v1970 = vpop.f32.mrf.mxu0
      %v1971 = vadd.f32 %v1791, %v1970
      %v1972 = vpop.f32.mrf.mxu0
      %1973 = vmatprep.mubr.f32.mxu0 0.0
      %1974 = vmatmul.mubr.f32.gmra.mxu0 %v1804
      %v1975 = vpop.f32.mrf.mxu0
      %v1976 = vadd.f32 %v1791, %v1975
      %v1977 = vpop.f32.mrf.mxu0
      %1978 = vmatprep.mubr.f32.mxu0 0.0
      %1979 = vmatmul.mubr.f32.gmra.mxu0 %v1807
      %v1980 = vpop.f32.mrf.mxu0
      %v1981 = vadd.f32 %v1791, %v1980
      %v1982 = vpop.f32.mrf.mxu0
      %1983 = vmatprep.mubr.f32.mxu0 0.0
      %1984 = vmatmul.mubr.f32.gmra.mxu0 %v1810
      %v1985 = vpop.f32.mrf.mxu0
      %v1986 = vadd.f32 %v1791, %v1985
      %v1987 = vpop.f32.mrf.mxu0
      %1988 = vmatprep.mubr.f32.mxu0 0.0
      %1989 = vmatmul.mubr.f32.gmra.mxu0 %v1813
      %v1990 = vpop.f32.mrf.mxu0
      %v1991 = vadd.f32 %v1791, %v1990
      %v1992 = vpop.f32.mrf.mxu0
      %1993 = vmatprep.mubr.f32.mxu0 0.0
      %1994 = vmatmul.mubr.f32.gmra.mxu0 %v1816
      %v1995 = vpop.f32.mrf.mxu0
      %v1996 = vadd.f32 %v1791, %v1995
      %v1997 = vpop.f32.mrf.mxu0
      %1998 = vmatprep.mubr.f32.mxu0 0.0
      %1999 = vmatmul.mubr.f32.gmra.mxu0 %v1819
      %v2000 = vpop.f32.mrf.mxu0
      %v2001 = vadd.f32 %v1791, %v2000
      %v2002 = vpop.f32.mrf.mxu0
      %2003 = vmatprep.mubr.f32.mxu0 0.0
      %2004 = vmatmul.mubr.f32.gmra.mxu0 %v1822
      %v2005 = vpop.f32.mrf.mxu0
      %v2006 = vadd.f32 %v1791, %v2005
      %v2007 = vpop.f32.mrf.mxu0
      %2008 = vmatprep.mubr.f32.mxu0 0.0
      %2009 = vmatmul.mubr.f32.gmra.mxu0 %v1825
      %v2010 = vpop.f32.mrf.mxu0
      %v2011 = vadd.f32 %v1791, %v2010
      %v2012 = vpop.f32.mrf.mxu0
      %2013 = vmatprep.mubr.f32.mxu0 0.0
      %2014 = vmatmul.mubr.f32.gmra.mxu0 %v1828
      %v2015 = vpop.f32.mrf.mxu0
      %v2016 = vadd.f32 %v1791, %v2015
      %v2017 = vpop.f32.mrf.mxu0
      %2018 = vmatprep.mubr.f32.mxu0 0.0
      %2019 = vmatmul.mubr.f32.gmra.mxu0 %v1831
      %v2020 = vpop.f32.mrf.mxu0
      %v2021 = vadd.f32 %v1791, %v2020
      %v2022 = vpop.f32.mrf.mxu0
      %2023 = vmatprep.mubr.f32.mxu0 0.0
      %2024 = vmatmul.mubr.f32.gmra.mxu0 %v1834
      %v2025 = vpop.f32.mrf.mxu0
      %v2026 = vadd.f32 %v1791, %v2025
      %v2027 = vpop.f32.mrf.mxu0
      %2028 = vmatprep.mubr.f32.mxu0 0.0
      %2029 = vmatmul.mubr.f32.gmra.mxu0 %v1837
      %v2030 = vpop.f32.mrf.mxu0
      %v2031 = vadd.f32 %v1791, %v2030
      %v2032 = vpop.f32.mrf.mxu0
      %2033 = vmatprep.mubr.f32.mxu0 0.0
      %2034 = vmatmul.mubr.f32.gmra.mxu0 %v1840
      %v2035 = vpop.f32.mrf.mxu0
      %v2036 = vadd.f32 %v1791, %v2035
      %v2037 = vpop.f32.mrf.mxu0
      %2038 = vmatprep.mubr.f32.mxu0 0.0
      %2039 = vmatmul.mubr.f32.gmra.mxu0 %v1843
      %v2040 = vpop.f32.mrf.mxu0
      %v2041 = vadd.f32 %v1791, %v2040
      %v2042 = vpop.f32.mrf.mxu0
      %2043 = vmatprep.mubr.f32.mxu0 0.0
      %2044 = vmatmul.mubr.f32.gmra.mxu0 %v1846
      %v2045 = vpop.f32.mrf.mxu0
      %v2046 = vadd.f32 %v1791, %v2045
      %v2047 = vpop.f32.mrf.mxu0
      %2048 = vmatprep.mubr.f32.mxu0 0.0
      %2049 = vmatmul.mubr.f32.gmra.mxu0 %v1849
      %v2050 = vpop.f32.mrf.mxu0
      %v2051 = vadd.f32 %v1791, %v2050
      %v2052 = vpop.f32.mrf.mxu0
      %2053 = vmatprep.mubr.f32.mxu0 0.0
      %2054 = vmatmul.mubr.f32.gmra.mxu0 %v1852
      %v2055 = vpop.f32.mrf.mxu0
      %v2056 = vadd.f32 %v1791, %v2055
      %v2057 = vpop.f32.mrf.mxu0
      %2058 = vmatprep.mubr.f32.mxu0 0.0
      %2059 = vmatmul.mubr.f32.gmra.mxu0 %v1855
      %v2060 = vpop.f32.mrf.mxu0
      %v2061 = vadd.f32 %v1791, %v2060
      %v2062 = vpop.f32.mrf.mxu0
      %2063 = vmatprep.mubr.f32.mxu0 0.0
      %2064 = vmatmul.mubr.f32.gmra.mxu0 %v1858
      %v2065 = vpop.f32.mrf.mxu0
      %v2066 = vadd.f32 %v1791, %v2065
      %v2067 = vpop.f32.mrf.mxu0
      %2068 = vmatprep.mubr.f32.mxu0 0.0
      %2069 = vmatmul.mubr.f32.gmra.mxu0 %v1861
      %v2070 = vpop.f32.mrf.mxu0
      %v2071 = vadd.f32 %v1791, %v2070
      %v2072 = vpop.f32.mrf.mxu0
      %2073 = vmatprep.mubr.f32.mxu0 0.0
      %2074 = vmatmul.mubr.f32.gmra.mxu0 %v1864
      %v2075 = vpop.f32.mrf.mxu0
      %v2076 = vadd.f32 %v1791, %v2075
      %v2077 = vpop.f32.mrf.mxu0
      %2078 = vmatprep.mubr.f32.mxu0 0.0
      %2079 = vmatmul.mubr.f32.gmra.mxu0 %v1867
      %v2080 = vpop.f32.mrf.mxu0
      %v2081 = vadd.f32 %v1791, %v2080
      %v2082 = vpop.f32.mrf.mxu0
      %2083 = vmatprep.mubr.f32.mxu0 0.0
      %2084 = vmatmul.mubr.f32.gmra.mxu0 %v1870
      %v2085 = vpop.f32.mrf.mxu0
      %v2086 = vadd.f32 %v1791, %v2085
      %v2087 = vpop.f32.mrf.mxu0
      %2088 = vmatprep.mubr.f32.mxu0 0.0
      %2089 = vmatmul.mubr.f32.gmra.mxu0 %v1873
      %v2090 = vpop.f32.mrf.mxu0
      %v2091 = vadd.f32 %v1791, %v2090
      %v2092 = vpop.f32.mrf.mxu0
      %2093 = vmatprep.mubr.f32.mxu0 0.0
      %2094 = vmatmul.mubr.f32.gmra.mxu0 %v1876
      %v2095 = vpop.f32.mrf.mxu0
      %v2096 = vadd.f32 %v1791, %v2095
      %v2097 = vpop.f32.mrf.mxu0
      %2098 = vmatprep.mubr.f32.mxu0 0.0
      %2099 = vmatmul.mubr.f32.gmra.mxu0 %v1879
      %v2100 = vpop.f32.mrf.mxu0
      %v2101 = vadd.f32 %v1791, %v2100
      %v2102 = vpop.f32.mrf.mxu0
      %2103 = vmatprep.mubr.f32.mxu0 0.0
      %2104 = vmatmul.mubr.f32.gmra.mxu0 %v1882
      %v2105 = vpop.f32.mrf.mxu0
      %v2106 = vadd.f32 %v1791, %v2105
      %v2107 = vpop.f32.mrf.mxu0
      %2108 = vmatprep.mubr.f32.mxu0 0.0
      %2109 = vmatmul.mubr.f32.gmra.mxu0 %v1885
      %v2110 = vpop.f32.mrf.mxu0
      %v2111 = vadd.f32 %v1791, %v2110
      %v2112 = vpop.f32.mrf.mxu0
      %2113 = vmatprep.mubr.f32.mxu0 0.0
      %2114 = vmatmul.mubr.f32.gmra.mxu0 %v1888
      %v2115 = vpop.f32.mrf.mxu0
      %v2116 = vadd.f32 %v1791, %v2115
      %v2117 = vpop.f32.mrf.mxu0
      %2118 = vdwg.mxu0
      %v2119 = vmax.f32 %v1961, 0.0
      %v2120 = vmax.f32 %v1966, 0.0
      %v2121 = vmax.f32 %v1971, 0.0
      %v2122 = vmax.f32 %v1976, 0.0
      %v2123 = vmax.f32 %v1981, 0.0
      %v2124 = vmax.f32 %v1986, 0.0
      %v2125 = vmax.f32 %v1991, 0.0
      %v2126 = vmax.f32 %v1996, 0.0
      %v2127 = vmax.f32 %v2001, 0.0
      %v2128 = vmax.f32 %v2006, 0.0
      %v2129 = vmax.f32 %v2011, 0.0
      %v2130 = vmax.f32 %v2016, 0.0
      %v2131 = vmax.f32 %v2021, 0.0
      %v2132 = vmax.f32 %v2026, 0.0
      %v2133 = vmax.f32 %v2031, 0.0
      %v2134 = vmax.f32 %v2036, 0.0
      %v2135 = vmax.f32 %v2041, 0.0
      %v2136 = vmax.f32 %v2046, 0.0
      %v2137 = vmax.f32 %v2051, 0.0
      %v2138 = vmax.f32 %v2056, 0.0
      %v2139 = vmax.f32 %v2061, 0.0
      %v2140 = vmax.f32 %v2066, 0.0
      %v2141 = vmax.f32 %v2071, 0.0
      %v2142 = vmax.f32 %v2076, 0.0
      %v2143 = vmax.f32 %v2081, 0.0
      %v2144 = vmax.f32 %v2086, 0.0
      %v2145 = vmax.f32 %v2091, 0.0
      %v2146 = vmax.f32 %v2096, 0.0
      %v2147 = vmax.f32 %v2101, 0.0
      %v2148 = vmax.f32 %v2106, 0.0
      %v2149 = vmax.f32 %v2111, 0.0
      %v2150 = vmax.f32 %v2116, 0.0
      %2151 = vst [vmem:[%s194] sm:$0xff] %v2119
      %2152 = vst [vmem:[%s194 + $0x8] sm:$0xff] %v2120
      %2153 = vst [vmem:[%s194 + $0x10] sm:$0xff] %v2121
      %2154 = vst [vmem:[%s194 + $0x18] sm:$0xff] %v2122
      %2155 = vst [vmem:[%s194 + $0x20] sm:$0xff] %v2123
      %2156 = vst [vmem:[%s194 + $0x28] sm:$0xff] %v2124
      %2157 = vst [vmem:[%s194 + $0x30] sm:$0xff] %v2125
      %2158 = vst [vmem:[%s194 + $0x38] sm:$0xff] %v2126
      %2159 = vst [vmem:[%s194 + $0x40] sm:$0xff] %v2127
      %2160 = vst [vmem:[%s194 + $0x48] sm:$0xff] %v2128
      %2161 = vst [vmem:[%s194 + $0x50] sm:$0xff] %v2129
      %2162 = vst [vmem:[%s194 + $0x58] sm:$0xff] %v2130
      %2163 = vst [vmem:[%s194 + $0x60] sm:$0xff] %v2131
      %2164 = vst [vmem:[%s194 + $0x68] sm:$0xff] %v2132
      %2165 = vst [vmem:[%s194 + $0x70] sm:$0xff] %v2133
      %2166 = vst [vmem:[%s194 + $0x78] sm:$0xff] %v2134
      %2167 = vst [vmem:[%s194 + $0x80] sm:$0xff] %v2135
      %2168 = vst [vmem:[%s194 + $0x88] sm:$0xff] %v2136
      %2169 = vst [vmem:[%s194 + $0x90] sm:$0xff] %v2137
      %2170 = vst [vmem:[%s194 + $0x98] sm:$0xff] %v2138
      %2171 = vst [vmem:[%s194 + $0xa0] sm:$0xff] %v2139
      %2172 = vst [vmem:[%s194 + $0xa8] sm:$0xff] %v2140
      %2173 = vst [vmem:[%s194 + $0xb0] sm:$0xff] %v2141
      %2174 = vst [vmem:[%s194 + $0xb8] sm:$0xff] %v2142
      %2175 = vst [vmem:[%s194 + $0xc0] sm:$0xff] %v2143
      %2176 = vst [vmem:[%s194 + $0xc8] sm:$0xff] %v2144
      %2177 = vst [vmem:[%s194 + $0xd0] sm:$0xff] %v2145
      %2178 = vst [vmem:[%s194 + $0xd8] sm:$0xff] %v2146
      %2179 = vst [vmem:[%s194 + $0xe0] sm:$0xff] %v2147
      %2180 = vst [vmem:[%s194 + $0xe8] sm:$0xff] %v2148
      %2181 = vst [vmem:[%s194 + $0xf0] sm:$0xff] %v2149
      %2182 = vst [vmem:[%s194 + $0xf8] sm:$0xff] %v2150
      %s2183 = smul.u32 16, %s19
      %p2184 = scmp.lt.s32.totalorder %s18, 1
      %s2185 = scalar_select %p2184, %s18, 1
      %p2186 = scmp.lt.s32.totalorder %s2183, 15
      %s2187 = scalar_select %p2186, %s2183, 15
      %s2188 = smul.addr %s2187, 2
      %s2189 = smul.addr %s2185, 32
      %s2190 = sadd.s32 %s2188, %s2189
      %s2191 = smul.addr %s2190, 8
      %s2192 = scalar_lea.vmem %s3, %s2191
      // Predicated region
      $region33: #{basic_conv_forward.1} parent=31 // pred_check
        %p2193 = pneg %p114
      $region34: #{basic_conv_forward.1} parent=31 // pred_check_branch
        %2195 = sbr.rel (%p2193) target = $region36
      $region35: #{basic_conv_forward.1} parent=31 // pred_region
        %s2196 = smul.u32 16, %s19
      $region36: #{basic_conv_forward.1} parent=31 // pred_fallthru
        _
    $region32: #{basic_conv_forward.1} parent=5 // pred_fallthru
      _
    %p2197 = scmp.le.s32.totalorder 2, %s9
    // Predicated region
    $region37: #{basic_conv_forward.1} parent=5 // pred_check
      %p2198 = pneg %p2197
    $region38: #{basic_conv_forward.1} parent=5 // pred_check_branch
      %2200 = sbr.rel (%p2198) target = $region40
    $region39: #{basic_conv_forward.1} parent=5 // pred_region
      %s2201 = ssub.s32 %s9, 2
      // Predicated region
      $region41: #{basic_conv_forward.1} parent=39 // pred_check
        %p2202 = pneg %p120
      $region42: #{basic_conv_forward.1} parent=39 // pred_check_branch
        %2204 = sbr.rel (%p2202) target = $region44
      $region43: #{basic_conv_forward.1} parent=39 // pred_region
        %s2205 = smul.u32 16, %s21
        %p2206 = scmp.lt.s32.totalorder %s20, 1
        %s2207 = scalar_select %p2206, %s20, 1
        %p2208 = scmp.lt.s32.totalorder %s2205, 15
        %s2209 = scalar_select %p2208, %s2205, 15
        %s2210 = smul.addr %s2209, 2
        %s2211 = smul.addr %s2207, 32
        %s2212 = sadd.s32 %s2210, %s2211
        %s2213 = smul.addr %s2212, 8
        %s2214 = scalar_lea.vmem %s3, %s2213
      $region44: #{basic_conv_forward.1} parent=39 // pred_fallthru
        _
    $region40: #{basic_conv_forward.1} parent=5 // pred_fallthru
      _
  $region6: #{basic_conv_forward.1} parent=0 // loop_footer
    %s13 = sadd.s32 1, %s9
  $region7: #{basic_conv_forward.1} parent=0 // loop_footer_branch
    %8 = sbr.rel target = $region3
  $region8: #{basic_conv_forward.1} parent=0 // loop_exit
    _

</llo_original>
